<compile_context>
chip_gen: v7x
topology: tpu7x:2x2x1
jax: 0.10.0
libtpu: 0.0.40
codegen_flags: <defaults>
</compile_context>

<pallas_src>
from functools import partial

import jax
import jax.numpy as jnp
from jax.experimental import pallas as pl
from jax.experimental.pallas import tpu as pltpu


# ----------------------------------------------------------------------------
# Fused kernel: LSTM over T (unrolled, serial) + rnn_fc + final_layer.
# ----------------------------------------------------------------------------
def rnn_decoder_kernel(x_ref, enc_ref, wih_ref, b_ref, whh_ref,
                       wfc_ref, bfc_ref, wfe_ref, wfh_ref, bf_ref,
                       out_ref, hid_scr):
    T, F, H = hid_scr.shape

    # ---- Hoisted input-to-hidden path: one tall matmul, bias folded. ------
    gx = (jnp.dot(x_ref[...], wih_ref[...],
                  preferred_element_type=jnp.float32)
          + b_ref[...])                                   # (T*F, 4H)

    whh = whh_ref[...]                                    # (H, 4H), loaded once

    h = jnp.zeros((F, H), jnp.float32)
    c = jnp.zeros((F, H), jnp.float32)

    # ---- Serial LSTM recurrence (fully unrolled; T is small). -------------
    # ONE fused recurrent matmul per step + ONE full-vreg add; the per-gate
    # split (PyTorch order i, f, g, o) happens after the add as 4 static
    # lane slices of the (F, 4H) = (8, 128) pre-activation.
    for t in range(T):
        g = (gx[t * F:(t + 1) * F, :]
             + jnp.dot(h, whh, preferred_element_type=jnp.float32))
        ig = jax.nn.sigmoid(g[:, 0 * H:1 * H])
        fg = jax.nn.sigmoid(g[:, 1 * H:2 * H])
        gg = jnp.tanh(g[:, 2 * H:3 * H])
        og = jax.nn.sigmoid(g[:, 3 * H:4 * H])
        c = fg * c + ig * gg
        h = og * jnp.tanh(c)
        hid_scr[t] = h                  # VMEM scratch only, no HBM store

    # ---- Head: rnn_fc on the flattened hidden states.  hidden.view(T, F*H)
    # @ W_fc^T as F independent lane-aligned (T,H)@(H,E) matmuls, combined
    # with a balanced tree (no serial add dependency chain).  A single
    # 2-dim-contraction dot_general is not reliably lowerable by Mosaic. ----
    hidden = hid_scr[...]                                 # (T, F, H)
    parts = [jnp.dot(hidden[:, f, :], wfc_ref[f],
                     preferred_element_type=jnp.float32)
             for f in range(F)]
    while len(parts) > 1:
        nxt = [parts[i] + parts[i + 1] for i in range(0, len(parts) - 1, 2)]
        if len(parts) % 2:
            nxt.append(parts[-1])
        parts = nxt
    h1 = parts[0] + bfc_ref[...]                          # (T, E)

    # ---- final_layer on concat([enc_out, h1]); weight split into halves
    # host-side, class dim zero-padded to 128 lanes (lane-dense store).
    # dropout(rate) is identity in eval mode. -------------------------------
    out_ref[...] = (jnp.dot(enc_ref[...], wfe_ref[...],
                            preferred_element_type=jnp.float32)
                    + jnp.dot(h1, wfh_ref[...],
                              preferred_element_type=jnp.float32)
                    + bf_ref[...])


# ----------------------------------------------------------------------------
# One-time host-side parameter preparation (OUTSIDE the jitted forward).
# ----------------------------------------------------------------------------
def prepare_params(p):
    """Pre-transpose / pre-split / pre-pad all weights once at load time."""
    H = p["w_hh"].shape[1]
    E, FH = p["w_fc"].shape
    F = FH // H
    C = p["w_final"].shape[0]
    C_pad = ((C + 127) // 128) * 128          # lane-dense final layer / store
    pad = C_pad - C

    wih_t = jnp.asarray(p["w_ih"], jnp.float32).T                 # (L, 4H)
    whh_t = jnp.asarray(p["w_hh"], jnp.float32).T                 # (H, 4H)
    wfin_e = jnp.asarray(p["w_final"][:, :E], jnp.float32).T      # (E, C)
    wfin_h = jnp.asarray(p["w_final"][:, E:], jnp.float32).T      # (E, C)
    return {
        "wih": wih_t,
        "bias": jnp.asarray(p["b_ih"] + p["b_hh"],
                            jnp.float32).reshape(1, 4 * H),       # (1, 4H)
        "whh": whh_t,                                             # (H, 4H) fused
        "wfc": jnp.asarray(p["w_fc"], jnp.float32).T.reshape(F, H, E),  # (F,H,E)
        "bfc": jnp.asarray(p["b_fc"], jnp.float32).reshape(1, E),
        "wfin_e": jnp.pad(wfin_e, ((0, 0), (0, pad))),            # (E, C_pad)
        "wfin_h": jnp.pad(wfin_h, ((0, 0), (0, pad))),            # (E, C_pad)
        "bfin": jnp.pad(jnp.asarray(p["b_final"],
                                    jnp.float32).reshape(1, C),
                        ((0, 0), (0, pad))),                      # (1, C_pad)
    }


# ----------------------------------------------------------------------------
# Full RNN_Decoder forward: a single fused grid-less pallas_call.
# ----------------------------------------------------------------------------
@partial(jax.jit, static_argnames=("n_class",))
def rnn_decoder_forward(enc_out, dec_inp, prep, *, n_class):
    T, F, L = dec_inp.shape
    H = prep["whh"].shape[0]
    C_pad = prep["bfin"].shape[1]

    x_flat = dec_inp.reshape(T * F, L)    # row-major collapse: free in XLA

    operands = (x_flat, enc_out,
                prep["wih"], prep["bias"], prep["whh"],
                prep["wfc"], prep["bfc"],
                prep["wfin_e"], prep["wfin_h"], prep["bfin"])

    out_pad = pl.pallas_call(
        rnn_decoder_kernel,
        out_shape=jax.ShapeDtypeStruct((T, C_pad), jnp.float32),
        in_specs=[pl.BlockSpec(memory_space=pltpu.MemorySpace.VMEM)
                  for _ in operands],
        out_specs=pl.BlockSpec(memory_space=pltpu.MemorySpace.VMEM),
        scratch_shapes=[pltpu.VMEM((T, F, H), jnp.float32)],  # hidden history
    )(*operands)
    return out_pad[:, :n_class]           # drop the zero-padded class lanes


# ----------------------------------------------------------------------------
# Pure-JAX reference (mirrors the PyTorch module) for correctness check.
# ----------------------------------------------------------------------------
def reference_forward(enc_out, dec_inp, p):
    T, F, L = dec_inp.shape
    H = p["w_hh"].shape[1]
    h = jnp.zeros((F, H), jnp.float32)
    c = jnp.zeros((F, H), jnp.float32)
    outs = []
    for t in range(T):
        gates = (dec_inp[t] @ p["w_ih"].T + h @ p["w_hh"].T
                 + p["b_ih"] + p["b_hh"])
        i = jax.nn.sigmoid(gates[:, :H])
        f = jax.nn.sigmoid(gates[:, H:2 * H])
        g = jnp.tanh(gates[:, 2 * H:3 * H])
        o = jax.nn.sigmoid(gates[:, 3 * H:])
        c = f * c + i * g
        h = o * jnp.tanh(c)
        outs.append(h)
    hidden = jnp.stack(outs).reshape(T, -1)
    h1 = hidden @ p["w_fc"].T + p["b_fc"]
    concat = jnp.concatenate([enc_out, h1], axis=1)
    return concat @ p["w_final"].T + p["b_final"]


# ----------------------------------------------------------------------------
# Main
# ----------------------------------------------------------------------------
if __name__ == "__main__":
    # Small shapes consistent with the module:
    #   max_len (LSTM input size) L = 24, embedding_dim (hidden) H = 32,
    #   num_features F = 8, class_n C = 16, fc width E = 128, batch T = 4.
    T, F, L, H, E, C = 4, 8, 24, 32, 128, 16

    key = jax.random.PRNGKey(0)
    ks = jax.random.split(key, 10)
    k_scale = 1.0 / jnp.sqrt(H)

    params = {
        "w_ih": jax.random.uniform(ks[0], (4 * H, L), jnp.float32, -k_scale, k_scale),
        "w_hh": jax.random.uniform(ks[1], (4 * H, H), jnp.float32, -k_scale, k_scale),
        "b_ih": jax.random.uniform(ks[2], (4 * H,), jnp.float32, -k_scale, k_scale),
        "b_hh": jax.random.uniform(ks[3], (4 * H,), jnp.float32, -k_scale, k_scale),
        "w_fc": jax.random.uniform(ks[4], (E, F * H), jnp.float32, -0.05, 0.05),
        "b_fc": jax.random.uniform(ks[5], (E,), jnp.float32, -0.05, 0.05),
        "w_final": jax.random.uniform(ks[6], (C, 2 * E), jnp.float32, -0.05, 0.05),
        "b_final": jax.random.uniform(ks[7], (C,), jnp.float32, -0.05, 0.05),
    }

    enc_out = jax.random.normal(ks[8], (T, E), jnp.float32)
    dec_inp = jax.random.normal(ks[9], (T, F, L), jnp.float32)

    prepared = prepare_params(params)          # one-time, outside jit

    out = rnn_decoder_forward(enc_out, dec_inp, prepared, n_class=C)
    out = jax.block_until_ready(out)

    ref = reference_forward(enc_out, dec_inp, params)
    assert out.shape == (T, C), out.shape
    assert jnp.allclose(out, ref, atol=1e-4, rtol=1e-4), \
        f"max abs err {jnp.max(jnp.abs(out - ref))}"

    print("KERNEL_OK")
</pallas_src>

<mosaic_0001>
module attributes {stable_mosaic.version = 11 : i64} {
  func.func @rnn_decoder_kernel(%arg0: memref<32x24xf32, #tpu.memory_space<vmem>>, %arg1: memref<4x128xf32, #tpu.memory_space<vmem>>, %arg2: memref<24x128xf32, #tpu.memory_space<vmem>>, %arg3: memref<1x128xf32, #tpu.memory_space<vmem>>, %arg4: memref<32x128xf32, #tpu.memory_space<vmem>>, %arg5: memref<8x32x128xf32, #tpu.memory_space<vmem>>, %arg6: memref<1x128xf32, #tpu.memory_space<vmem>>, %arg7: memref<128x128xf32, #tpu.memory_space<vmem>>, %arg8: memref<128x128xf32, #tpu.memory_space<vmem>>, %arg9: memref<1x128xf32, #tpu.memory_space<vmem>>, %arg10: memref<4x128xf32, #tpu.memory_space<vmem>>, %arg11: memref<4x8x32xf32, #tpu.memory_space<vmem>>) attributes {dimension_semantics = [], scalar_prefetch = 0 : i64, scratch_operands = 1 : i64, tpu.core_type = #tpu.core_type<tc>} {
    %c0 = arith.constant 0 : index
    %c0_0 = arith.constant 0 : index
    %0 = vector.load %arg0[%c0, %c0_0] : memref<32x24xf32, #tpu.memory_space<vmem>>, vector<32x24xf32>
    %c0_1 = arith.constant 0 : index
    %c0_2 = arith.constant 0 : index
    %1 = vector.load %arg2[%c0_1, %c0_2] : memref<24x128xf32, #tpu.memory_space<vmem>>, vector<24x128xf32>
    %cst = arith.constant dense<0.000000e+00> : vector<32x128xf32>
    %2 = tpu.matmul %0, %1, %cst {dimension_numbers = #tpu.dot_dimension_numbers<[1], [0], [0], [1], [0, 0, 1, 1], [], []>} : vector<32x24xf32>, vector<24x128xf32>, vector<32x128xf32> -> vector<32x128xf32>
    %c0_3 = arith.constant 0 : index
    %c0_4 = arith.constant 0 : index
    %3 = vector.load %arg3[%c0_3, %c0_4] : memref<1x128xf32, #tpu.memory_space<vmem>>, vector<1x128xf32>
    %4 = vector.broadcast %3 : vector<1x128xf32> to vector<32x128xf32>
    %5 = arith.addf %2, %4 : vector<32x128xf32>
    %c0_5 = arith.constant 0 : index
    %c0_6 = arith.constant 0 : index
    %6 = vector.load %arg4[%c0_5, %c0_6] : memref<32x128xf32, #tpu.memory_space<vmem>>, vector<32x128xf32>
    %cst_7 = arith.constant 0.000000e+00 : f32
    %7 = vector.broadcast %cst_7 : f32 to vector<8x32xf32>
    %cst_8 = arith.constant 0.000000e+00 : f32
    %8 = vector.broadcast %cst_8 : f32 to vector<8x32xf32>
    %9 = vector.extract_strided_slice %5 {offsets = [0, 0], sizes = [8, 128], strides = [1, 1]} : vector<32x128xf32> to vector<8x128xf32>
    %cst_9 = arith.constant dense<0.000000e+00> : vector<8x128xf32>
    %10 = tpu.matmul %7, %6, %cst_9 {dimension_numbers = #tpu.dot_dimension_numbers<[1], [0], [0], [1], [0, 0, 1, 1], [], []>} : vector<8x32xf32>, vector<32x128xf32>, vector<8x128xf32> -> vector<8x128xf32>
    %11 = arith.addf %9, %10 : vector<8x128xf32>
    %12 = vector.extract_strided_slice %11 {offsets = [0, 0], sizes = [8, 32], strides = [1, 1]} : vector<8x128xf32> to vector<8x32xf32>
    %13 = arith.negf %12 : vector<8x32xf32>
    %14 = math.exp %13 : vector<8x32xf32>
    %cst_10 = arith.constant 1.000000e+00 : f32
    %15 = vector.broadcast %cst_10 : f32 to vector<8x32xf32>
    %16 = arith.addf %15, %14 : vector<8x32xf32>
    %17 = arith.divf %15, %16 : vector<8x32xf32>
    %18 = vector.extract_strided_slice %11 {offsets = [0, 32], sizes = [8, 32], strides = [1, 1]} : vector<8x128xf32> to vector<8x32xf32>
    %19 = arith.negf %18 : vector<8x32xf32>
    %20 = math.exp %19 : vector<8x32xf32>
    %cst_11 = arith.constant 1.000000e+00 : f32
    %21 = vector.broadcast %cst_11 : f32 to vector<8x32xf32>
    %22 = arith.addf %21, %20 : vector<8x32xf32>
    %23 = arith.divf %21, %22 : vector<8x32xf32>
    %24 = vector.extract_strided_slice %11 {offsets = [0, 64], sizes = [8, 32], strides = [1, 1]} : vector<8x128xf32> to vector<8x32xf32>
    %25 = math.tanh %24 : vector<8x32xf32>
    %26 = vector.extract_strided_slice %11 {offsets = [0, 96], sizes = [8, 32], strides = [1, 1]} : vector<8x128xf32> to vector<8x32xf32>
    %27 = arith.negf %26 : vector<8x32xf32>
    %28 = math.exp %27 : vector<8x32xf32>
    %cst_12 = arith.constant 1.000000e+00 : f32
    %29 = vector.broadcast %cst_12 : f32 to vector<8x32xf32>
    %30 = arith.addf %29, %28 : vector<8x32xf32>
    %31 = arith.divf %29, %30 : vector<8x32xf32>
    %32 = arith.mulf %23, %8 : vector<8x32xf32>
    %33 = arith.mulf %17, %25 : vector<8x32xf32>
    %34 = arith.addf %32, %33 : vector<8x32xf32>
    %35 = math.tanh %34 : vector<8x32xf32>
    %36 = arith.mulf %31, %35 : vector<8x32xf32>
    %c0_13 = arith.constant 0 : index
    %c0_14 = arith.constant 0 : index
    %c0_15 = arith.constant 0 : index
    %37 = vector.load %arg11[%c0_13, %c0_14, %c0_15] : memref<4x8x32xf32, #tpu.memory_space<vmem>>, vector<1x8x32xf32>
    %38 = vector.shape_cast %37 : vector<1x8x32xf32> to vector<8x32xf32>
    %39 = vector.shape_cast %36 : vector<8x32xf32> to vector<1x8x32xf32>
    tpu.vector_store %arg11[%c0_13, %c0_14, %c0_15], %39 {strides = array<i32>} : memref<4x8x32xf32, #tpu.memory_space<vmem>>, vector<1x8x32xf32>,
    %40 = vector.extract_strided_slice %5 {offsets = [8, 0], sizes = [8, 128], strides = [1, 1]} : vector<32x128xf32> to vector<8x128xf32>
    %cst_16 = arith.constant dense<0.000000e+00> : vector<8x128xf32>
    %41 = tpu.matmul %36, %6, %cst_16 {dimension_numbers = #tpu.dot_dimension_numbers<[1], [0], [0], [1], [0, 0, 1, 1], [], []>} : vector<8x32xf32>, vector<32x128xf32>, vector<8x128xf32> -> vector<8x128xf32>
    %42 = arith.addf %40, %41 : vector<8x128xf32>
    %43 = vector.extract_strided_slice %42 {offsets = [0, 0], sizes = [8, 32], strides = [1, 1]} : vector<8x128xf32> to vector<8x32xf32>
    %44 = arith.negf %43 : vector<8x32xf32>
    %45 = math.exp %44 : vector<8x32xf32>
    %cst_17 = arith.constant 1.000000e+00 : f32
    %46 = vector.broadcast %cst_17 : f32 to vector<8x32xf32>
    %47 = arith.addf %46, %45 : vector<8x32xf32>
    %48 = arith.divf %46, %47 : vector<8x32xf32>
    %49 = vector.extract_strided_slice %42 {offsets = [0, 32], sizes = [8, 32], strides = [1, 1]} : vector<8x128xf32> to vector<8x32xf32>
    %50 = arith.negf %49 : vector<8x32xf32>
    %51 = math.exp %50 : vector<8x32xf32>
    %cst_18 = arith.constant 1.000000e+00 : f32
    %52 = vector.broadcast %cst_18 : f32 to vector<8x32xf32>
    %53 = arith.addf %52, %51 : vector<8x32xf32>
    %54 = arith.divf %52, %53 : vector<8x32xf32>
    %55 = vector.extract_strided_slice %42 {offsets = [0, 64], sizes = [8, 32], strides = [1, 1]} : vector<8x128xf32> to vector<8x32xf32>
    %56 = math.tanh %55 : vector<8x32xf32>
    %57 = vector.extract_strided_slice %42 {offsets = [0, 96], sizes = [8, 32], strides = [1, 1]} : vector<8x128xf32> to vector<8x32xf32>
    %58 = arith.negf %57 : vector<8x32xf32>
    %59 = math.exp %58 : vector<8x32xf32>
    %cst_19 = arith.constant 1.000000e+00 : f32
    %60 = vector.broadcast %cst_19 : f32 to vector<8x32xf32>
    %61 = arith.addf %60, %59 : vector<8x32xf32>
    %62 = arith.divf %60, %61 : vector<8x32xf32>
    %63 = arith.mulf %54, %34 : vector<8x32xf32>
    %64 = arith.mulf %48, %56 : vector<8x32xf32>
    %65 = arith.addf %63, %64 : vector<8x32xf32>
    %66 = math.tanh %65 : vector<8x32xf32>
    %67 = arith.mulf %62, %66 : vector<8x32xf32>
    %c1 = arith.constant 1 : index
    %c0_20 = arith.constant 0 : index
    %c0_21 = arith.constant 0 : index
    %68 = vector.load %arg11[%c1, %c0_20, %c0_21] : memref<4x8x32xf32, #tpu.memory_space<vmem>>, vector<1x8x32xf32>
    %69 = vector.shape_cast %68 : vector<1x8x32xf32> to vector<8x32xf32>
    %70 = vector.shape_cast %67 : vector<8x32xf32> to vector<1x8x32xf32>
    tpu.vector_store %arg11[%c1, %c0_20, %c0_21], %70 {strides = array<i32>} : memref<4x8x32xf32, #tpu.memory_space<vmem>>, vector<1x8x32xf32>,
    %71 = vector.extract_strided_slice %5 {offsets = [16, 0], sizes = [8, 128], strides = [1, 1]} : vector<32x128xf32> to vector<8x128xf32>
    %cst_22 = arith.constant dense<0.000000e+00> : vector<8x128xf32>
    %72 = tpu.matmul %67, %6, %cst_22 {dimension_numbers = #tpu.dot_dimension_numbers<[1], [0], [0], [1], [0, 0, 1, 1], [], []>} : vector<8x32xf32>, vector<32x128xf32>, vector<8x128xf32> -> vector<8x128xf32>
    %73 = arith.addf %71, %72 : vector<8x128xf32>
    %74 = vector.extract_strided_slice %73 {offsets = [0, 0], sizes = [8, 32], strides = [1, 1]} : vector<8x128xf32> to vector<8x32xf32>
    %75 = arith.negf %74 : vector<8x32xf32>
    %76 = math.exp %75 : vector<8x32xf32>
    %cst_23 = arith.constant 1.000000e+00 : f32
    %77 = vector.broadcast %cst_23 : f32 to vector<8x32xf32>
    %78 = arith.addf %77, %76 : vector<8x32xf32>
    %79 = arith.divf %77, %78 : vector<8x32xf32>
    %80 = vector.extract_strided_slice %73 {offsets = [0, 32], sizes = [8, 32], strides = [1, 1]} : vector<8x128xf32> to vector<8x32xf32>
    %81 = arith.negf %80 : vector<8x32xf32>
    %82 = math.exp %81 : vector<8x32xf32>
    %cst_24 = arith.constant 1.000000e+00 : f32
    %83 = vector.broadcast %cst_24 : f32 to vector<8x32xf32>
    %84 = arith.addf %83, %82 : vector<8x32xf32>
    %85 = arith.divf %83, %84 : vector<8x32xf32>
    %86 = vector.extract_strided_slice %73 {offsets = [0, 64], sizes = [8, 32], strides = [1, 1]} : vector<8x128xf32> to vector<8x32xf32>
    %87 = math.tanh %86 : vector<8x32xf32>
    %88 = vector.extract_strided_slice %73 {offsets = [0, 96], sizes = [8, 32], strides = [1, 1]} : vector<8x128xf32> to vector<8x32xf32>
    %89 = arith.negf %88 : vector<8x32xf32>
    %90 = math.exp %89 : vector<8x32xf32>
    %cst_25 = arith.constant 1.000000e+00 : f32
    %91 = vector.broadcast %cst_25 : f32 to vector<8x32xf32>
    %92 = arith.addf %91, %90 : vector<8x32xf32>
    %93 = arith.divf %91, %92 : vector<8x32xf32>
    %94 = arith.mulf %85, %65 : vector<8x32xf32>
    %95 = arith.mulf %79, %87 : vector<8x32xf32>
    %96 = arith.addf %94, %95 : vector<8x32xf32>
    %97 = math.tanh %96 : vector<8x32xf32>
    %98 = arith.mulf %93, %97 : vector<8x32xf32>
    %c2 = arith.constant 2 : index
    %c0_26 = arith.constant 0 : index
    %c0_27 = arith.constant 0 : index
    %99 = vector.load %arg11[%c2, %c0_26, %c0_27] : memref<4x8x32xf32, #tpu.memory_space<vmem>>, vector<1x8x32xf32>
    %100 = vector.shape_cast %99 : vector<1x8x32xf32> to vector<8x32xf32>
    %101 = vector.shape_cast %98 : vector<8x32xf32> to vector<1x8x32xf32>
    tpu.vector_store %arg11[%c2, %c0_26, %c0_27], %101 {strides = array<i32>} : memref<4x8x32xf32, #tpu.memory_space<vmem>>, vector<1x8x32xf32>,
    %102 = vector.extract_strided_slice %5 {offsets = [24, 0], sizes = [8, 128], strides = [1, 1]} : vector<32x128xf32> to vector<8x128xf32>
    %cst_28 = arith.constant dense<0.000000e+00> : vector<8x128xf32>
    %103 = tpu.matmul %98, %6, %cst_28 {dimension_numbers = #tpu.dot_dimension_numbers<[1], [0], [0], [1], [0, 0, 1, 1], [], []>} : vector<8x32xf32>, vector<32x128xf32>, vector<8x128xf32> -> vector<8x128xf32>
    %104 = arith.addf %102, %103 : vector<8x128xf32>
    %105 = vector.extract_strided_slice %104 {offsets = [0, 0], sizes = [8, 32], strides = [1, 1]} : vector<8x128xf32> to vector<8x32xf32>
    %106 = arith.negf %105 : vector<8x32xf32>
    %107 = math.exp %106 : vector<8x32xf32>
    %cst_29 = arith.constant 1.000000e+00 : f32
    %108 = vector.broadcast %cst_29 : f32 to vector<8x32xf32>
    %109 = arith.addf %108, %107 : vector<8x32xf32>
    %110 = arith.divf %108, %109 : vector<8x32xf32>
    %111 = vector.extract_strided_slice %104 {offsets = [0, 32], sizes = [8, 32], strides = [1, 1]} : vector<8x128xf32> to vector<8x32xf32>
    %112 = arith.negf %111 : vector<8x32xf32>
    %113 = math.exp %112 : vector<8x32xf32>
    %cst_30 = arith.constant 1.000000e+00 : f32
    %114 = vector.broadcast %cst_30 : f32 to vector<8x32xf32>
    %115 = arith.addf %114, %113 : vector<8x32xf32>
    %116 = arith.divf %114, %115 : vector<8x32xf32>
    %117 = vector.extract_strided_slice %104 {offsets = [0, 64], sizes = [8, 32], strides = [1, 1]} : vector<8x128xf32> to vector<8x32xf32>
    %118 = math.tanh %117 : vector<8x32xf32>
    %119 = vector.extract_strided_slice %104 {offsets = [0, 96], sizes = [8, 32], strides = [1, 1]} : vector<8x128xf32> to vector<8x32xf32>
    %120 = arith.negf %119 : vector<8x32xf32>
    %121 = math.exp %120 : vector<8x32xf32>
    %cst_31 = arith.constant 1.000000e+00 : f32
    %122 = vector.broadcast %cst_31 : f32 to vector<8x32xf32>
    %123 = arith.addf %122, %121 : vector<8x32xf32>
    %124 = arith.divf %122, %123 : vector<8x32xf32>
    %125 = arith.mulf %116, %96 : vector<8x32xf32>
    %126 = arith.mulf %110, %118 : vector<8x32xf32>
    %127 = arith.addf %125, %126 : vector<8x32xf32>
    %128 = math.tanh %127 : vector<8x32xf32>
    %129 = arith.mulf %124, %128 : vector<8x32xf32>
    %c3 = arith.constant 3 : index
    %c0_32 = arith.constant 0 : index
    %c0_33 = arith.constant 0 : index
    %130 = vector.load %arg11[%c3, %c0_32, %c0_33] : memref<4x8x32xf32, #tpu.memory_space<vmem>>, vector<1x8x32xf32>
    %131 = vector.shape_cast %130 : vector<1x8x32xf32> to vector<8x32xf32>
    %132 = vector.shape_cast %129 : vector<8x32xf32> to vector<1x8x32xf32>
    tpu.vector_store %arg11[%c3, %c0_32, %c0_33], %132 {strides = array<i32>} : memref<4x8x32xf32, #tpu.memory_space<vmem>>, vector<1x8x32xf32>,
    %c0_34 = arith.constant 0 : index
    %c0_35 = arith.constant 0 : index
    %c0_36 = arith.constant 0 : index
    %133 = vector.load %arg11[%c0_34, %c0_35, %c0_36] : memref<4x8x32xf32, #tpu.memory_space<vmem>>, vector<4x8x32xf32>
    %134 = vector.extract_strided_slice %133 {offsets = [0, 0, 0], sizes = [4, 1, 32], strides = [1, 1, 1]} : vector<4x8x32xf32> to vector<4x1x32xf32>
    %135 = vector.shape_cast %134 : vector<4x1x32xf32> to vector<4x32xf32>
    %c0_37 = arith.constant 0 : index
    %c0_38 = arith.constant 0 : index
    %c0_39 = arith.constant 0 : index
    %136 = vector.load %arg5[%c0_37, %c0_38, %c0_39] : memref<8x32x128xf32, #tpu.memory_space<vmem>>, vector<1x32x128xf32>
    %137 = vector.shape_cast %136 : vector<1x32x128xf32> to vector<32x128xf32>
    %cst_40 = arith.constant dense<0.000000e+00> : vector<4x128xf32>
    %138 = tpu.matmul %135, %137, %cst_40 {dimension_numbers = #tpu.dot_dimension_numbers<[1], [0], [0], [1], [0, 0, 1, 1], [], []>} : vector<4x32xf32>, vector<32x128xf32>, vector<4x128xf32> -> vector<4x128xf32>
    %139 = vector.extract_strided_slice %133 {offsets = [0, 1, 0], sizes = [4, 1, 32], strides = [1, 1, 1]} : vector<4x8x32xf32> to vector<4x1x32xf32>
    %140 = vector.shape_cast %139 : vector<4x1x32xf32> to vector<4x32xf32>
    %c1_41 = arith.constant 1 : index
    %c0_42 = arith.constant 0 : index
    %c0_43 = arith.constant 0 : index
    %141 = vector.load %arg5[%c1_41, %c0_42, %c0_43] : memref<8x32x128xf32, #tpu.memory_space<vmem>>, vector<1x32x128xf32>
    %142 = vector.shape_cast %141 : vector<1x32x128xf32> to vector<32x128xf32>
    %cst_44 = arith.constant dense<0.000000e+00> : vector<4x128xf32>
    %143 = tpu.matmul %140, %142, %cst_44 {dimension_numbers = #tpu.dot_dimension_numbers<[1], [0], [0], [1], [0, 0, 1, 1], [], []>} : vector<4x32xf32>, vector<32x128xf32>, vector<4x128xf32> -> vector<4x128xf32>
    %144 = vector.extract_strided_slice %133 {offsets = [0, 2, 0], sizes = [4, 1, 32], strides = [1, 1, 1]} : vector<4x8x32xf32> to vector<4x1x32xf32>
    %145 = vector.shape_cast %144 : vector<4x1x32xf32> to vector<4x32xf32>
    %c2_45 = arith.constant 2 : index
    %c0_46 = arith.constant 0 : index
    %c0_47 = arith.constant 0 : index
    %146 = vector.load %arg5[%c2_45, %c0_46, %c0_47] : memref<8x32x128xf32, #tpu.memory_space<vmem>>, vector<1x32x128xf32>
    %147 = vector.shape_cast %146 : vector<1x32x128xf32> to vector<32x128xf32>
    %cst_48 = arith.constant dense<0.000000e+00> : vector<4x128xf32>
    %148 = tpu.matmul %145, %147, %cst_48 {dimension_numbers = #tpu.dot_dimension_numbers<[1], [0], [0], [1], [0, 0, 1, 1], [], []>} : vector<4x32xf32>, vector<32x128xf32>, vector<4x128xf32> -> vector<4x128xf32>
    %149 = vector.extract_strided_slice %133 {offsets = [0, 3, 0], sizes = [4, 1, 32], strides = [1, 1, 1]} : vector<4x8x32xf32> to vector<4x1x32xf32>
    %150 = vector.shape_cast %149 : vector<4x1x32xf32> to vector<4x32xf32>
    %c3_49 = arith.constant 3 : index
    %c0_50 = arith.constant 0 : index
    %c0_51 = arith.constant 0 : index
    %151 = vector.load %arg5[%c3_49, %c0_50, %c0_51] : memref<8x32x128xf32, #tpu.memory_space<vmem>>, vector<1x32x128xf32>
    %152 = vector.shape_cast %151 : vector<1x32x128xf32> to vector<32x128xf32>
    %cst_52 = arith.constant dense<0.000000e+00> : vector<4x128xf32>
    %153 = tpu.matmul %150, %152, %cst_52 {dimension_numbers = #tpu.dot_dimension_numbers<[1], [0], [0], [1], [0, 0, 1, 1], [], []>} : vector<4x32xf32>, vector<32x128xf32>, vector<4x128xf32> -> vector<4x128xf32>
    %154 = vector.extract_strided_slice %133 {offsets = [0, 4, 0], sizes = [4, 1, 32], strides = [1, 1, 1]} : vector<4x8x32xf32> to vector<4x1x32xf32>
    %155 = vector.shape_cast %154 : vector<4x1x32xf32> to vector<4x32xf32>
    %c4 = arith.constant 4 : index
    %c0_53 = arith.constant 0 : index
    %c0_54 = arith.constant 0 : index
    %156 = vector.load %arg5[%c4, %c0_53, %c0_54] : memref<8x32x128xf32, #tpu.memory_space<vmem>>, vector<1x32x128xf32>
    %157 = vector.shape_cast %156 : vector<1x32x128xf32> to vector<32x128xf32>
    %cst_55 = arith.constant dense<0.000000e+00> : vector<4x128xf32>
    %158 = tpu.matmul %155, %157, %cst_55 {dimension_numbers = #tpu.dot_dimension_numbers<[1], [0], [0], [1], [0, 0, 1, 1], [], []>} : vector<4x32xf32>, vector<32x128xf32>, vector<4x128xf32> -> vector<4x128xf32>
    %159 = vector.extract_strided_slice %133 {offsets = [0, 5, 0], sizes = [4, 1, 32], strides = [1, 1, 1]} : vector<4x8x32xf32> to vector<4x1x32xf32>
    %160 = vector.shape_cast %159 : vector<4x1x32xf32> to vector<4x32xf32>
    %c5 = arith.constant 5 : index
    %c0_56 = arith.constant 0 : index
    %c0_57 = arith.constant 0 : index
    %161 = vector.load %arg5[%c5, %c0_56, %c0_57] : memref<8x32x128xf32, #tpu.memory_space<vmem>>, vector<1x32x128xf32>
    %162 = vector.shape_cast %161 : vector<1x32x128xf32> to vector<32x128xf32>
    %cst_58 = arith.constant dense<0.000000e+00> : vector<4x128xf32>
    %163 = tpu.matmul %160, %162, %cst_58 {dimension_numbers = #tpu.dot_dimension_numbers<[1], [0], [0], [1], [0, 0, 1, 1], [], []>} : vector<4x32xf32>, vector<32x128xf32>, vector<4x128xf32> -> vector<4x128xf32>
    %164 = vector.extract_strided_slice %133 {offsets = [0, 6, 0], sizes = [4, 1, 32], strides = [1, 1, 1]} : vector<4x8x32xf32> to vector<4x1x32xf32>
    %165 = vector.shape_cast %164 : vector<4x1x32xf32> to vector<4x32xf32>
    %c6 = arith.constant 6 : index
    %c0_59 = arith.constant 0 : index
    %c0_60 = arith.constant 0 : index
    %166 = vector.load %arg5[%c6, %c0_59, %c0_60] : memref<8x32x128xf32, #tpu.memory_space<vmem>>, vector<1x32x128xf32>
    %167 = vector.shape_cast %166 : vector<1x32x128xf32> to vector<32x128xf32>
    %cst_61 = arith.constant dense<0.000000e+00> : vector<4x128xf32>
    %168 = tpu.matmul %165, %167, %cst_61 {dimension_numbers = #tpu.dot_dimension_numbers<[1], [0], [0], [1], [0, 0, 1, 1], [], []>} : vector<4x32xf32>, vector<32x128xf32>, vector<4x128xf32> -> vector<4x128xf32>
    %169 = vector.extract_strided_slice %133 {offsets = [0, 7, 0], sizes = [4, 1, 32], strides = [1, 1, 1]} : vector<4x8x32xf32> to vector<4x1x32xf32>
    %170 = vector.shape_cast %169 : vector<4x1x32xf32> to vector<4x32xf32>
    %c7 = arith.constant 7 : index
    %c0_62 = arith.constant 0 : index
    %c0_63 = arith.constant 0 : index
    %171 = vector.load %arg5[%c7, %c0_62, %c0_63] : memref<8x32x128xf32, #tpu.memory_space<vmem>>, vector<1x32x128xf32>
    %172 = vector.shape_cast %171 : vector<1x32x128xf32> to vector<32x128xf32>
    %cst_64 = arith.constant dense<0.000000e+00> : vector<4x128xf32>
    %173 = tpu.matmul %170, %172, %cst_64 {dimension_numbers = #tpu.dot_dimension_numbers<[1], [0], [0], [1], [0, 0, 1, 1], [], []>} : vector<4x32xf32>, vector<32x128xf32>, vector<4x128xf32> -> vector<4x128xf32>
    %174 = arith.addf %138, %143 : vector<4x128xf32>
    %175 = arith.addf %148, %153 : vector<4x128xf32>
    %176 = arith.addf %158, %163 : vector<4x128xf32>
    %177 = arith.addf %168, %173 : vector<4x128xf32>
    %178 = arith.addf %174, %175 : vector<4x128xf32>
    %179 = arith.addf %176, %177 : vector<4x128xf32>
    %180 = arith.addf %178, %179 : vector<4x128xf32>
    %c0_65 = arith.constant 0 : index
    %c0_66 = arith.constant 0 : index
    %181 = vector.load %arg6[%c0_65, %c0_66] : memref<1x128xf32, #tpu.memory_space<vmem>>, vector<1x128xf32>
    %182 = vector.broadcast %181 : vector<1x128xf32> to vector<4x128xf32>
    %183 = arith.addf %180, %182 : vector<4x128xf32>
    %c0_67 = arith.constant 0 : index
    %c0_68 = arith.constant 0 : index
    %184 = vector.load %arg1[%c0_67, %c0_68] : memref<4x128xf32, #tpu.memory_space<vmem>>, vector<4x128xf32>
    %c0_69 = arith.constant 0 : index
    %c0_70 = arith.constant 0 : index
    %185 = vector.load %arg7[%c0_69, %c0_70] : memref<128x128xf32, #tpu.memory_space<vmem>>, vector<128x128xf32>
    %cst_71 = arith.constant dense<0.000000e+00> : vector<4x128xf32>
    %186 = tpu.matmul %184, %185, %cst_71 {dimension_numbers = #tpu.dot_dimension_numbers<[1], [0], [0], [1], [0, 0, 1, 1], [], []>} : vector<4x128xf32>, vector<128x128xf32>, vector<4x128xf32> -> vector<4x128xf32>
    %c0_72 = arith.constant 0 : index
    %c0_73 = arith.constant 0 : index
    %187 = vector.load %arg8[%c0_72, %c0_73] : memref<128x128xf32, #tpu.memory_space<vmem>>, vector<128x128xf32>
    %cst_74 = arith.constant dense<0.000000e+00> : vector<4x128xf32>
    %188 = tpu.matmul %183, %187, %cst_74 {dimension_numbers = #tpu.dot_dimension_numbers<[1], [0], [0], [1], [0, 0, 1, 1], [], []>} : vector<4x128xf32>, vector<128x128xf32>, vector<4x128xf32> -> vector<4x128xf32>
    %189 = arith.addf %186, %188 : vector<4x128xf32>
    %c0_75 = arith.constant 0 : index
    %c0_76 = arith.constant 0 : index
    %190 = vector.load %arg9[%c0_75, %c0_76] : memref<1x128xf32, #tpu.memory_space<vmem>>, vector<1x128xf32>
    %191 = vector.broadcast %190 : vector<1x128xf32> to vector<4x128xf32>
    %192 = arith.addf %189, %191 : vector<4x128xf32>
    %c0_77 = arith.constant 0 : index
    %c0_78 = arith.constant 0 : index
    %193 = vector.load %arg10[%c0_77, %c0_78] : memref<4x128xf32, #tpu.memory_space<vmem>>, vector<4x128xf32>
    tpu.vector_store %arg10[%c0_77, %c0_78], %192 {strides = array<i32>} : memref<4x128xf32, #tpu.memory_space<vmem>>, vector<4x128xf32>,
    return
  }
}

</mosaic_0001>

<llo_original>
// kernel: rnn_decoder_forward.1
$region0: #{rnn_decoder_forward.1}
  #allocation0 [shape = 'u32[]', space=smem, size = 0x4, offset = 0x4, fixed_abs, tag = 'smem constant byte address 0x4 - core index']
  #allocation1 [shape = 'u32[144,128]{1,0:T(1,128)}', space=vmem, size = 0x12000, scoped, tag = 'internal scratch']
  #allocation2 [shape = 'f32[4,8,32]{2,1,0:T(8,128)}', space=vmem, size = 0x4000, scoped, tag = 'scratch operand']
  %s0 = inlined_call_operand.hbm [shape: f32[32,24], index: 0, kind: input, shape index: {}]
  %s1 = inlined_call_operand.hbm [shape: f32[4,128], index: 1, kind: input, shape index: {}]
  %s2 = inlined_call_operand.hbm [shape: f32[24,128], index: 2, kind: input, shape index: {}]
  %s3 = inlined_call_operand.vmem [shape: f32[1,128], index: 3, kind: input, shape index: {}]
  %s4 = inlined_call_operand.vmem [shape: f32[32,128], index: 4, kind: input, shape index: {}]
  %s5 = inlined_call_operand.hbm [shape: f32[8,32,128], index: 5, kind: input, shape index: {}]
  %s6 = inlined_call_operand.vmem [shape: f32[1,128], index: 6, kind: input, shape index: {}]
  %s7 = inlined_call_operand.hbm [shape: f32[128,128], index: 7, kind: input, shape index: {}]
  %s8 = inlined_call_operand.hbm [shape: f32[128,128], index: 8, kind: input, shape index: {}]
  %s9 = inlined_call_operand.hbm [shape: f32[1,128], index: 9, kind: input, shape index: {}]
  %s10 = inlined_call_operand.hbm [shape: f32[4,128], index: 10, kind: output, shape index: {}]
  %s11 = sld [smem:[#allocation0]]
  $region78: #{rnn_decoder_forward.1} parent=0
    _
  %s13 = ssub.s32 1, %s11
  %s14 = scalar_select 0, %s13, %s11
  $region1: #{rnn_decoder_forward.1} parent=0
    #allocation3 [shape = 'u8[16384]{0}', space=vmem, size = 0x4000, scoped, tag = 'input window, operand 0, single buffered']
    #allocation4 [shape = 's32[1]{0}', space=sflag, size = 0x4, scoped, tag = 'scoped memory for rnn_decoder_forward.1']
    #allocation5 [shape = 's32[1]{0}', space=sflag, size = 0x4, scoped, tag = 'scoped memory for rnn_decoder_forward.1']
    #allocation6 [shape = 'u8[2048]{0}', space=vmem, size = 0x800, scoped, tag = 'input window, operand 1, single buffered']
    #allocation7 [shape = 's32[1]{0}', space=sflag, size = 0x4, scoped, tag = 'scoped memory for rnn_decoder_forward.1']
    #allocation8 [shape = 'u8[12288]{0}', space=vmem, size = 0x3000, scoped, tag = 'input window, operand 2, single buffered']
    #allocation9 [shape = 'u8[131072]{0}', space=vmem, size = 0x20000, scoped, tag = 'input window, operand 5, single buffered']
    #allocation10 [shape = 's32[1]{0}', space=sflag, size = 0x4, scoped, tag = 'scoped memory for rnn_decoder_forward.1']
    #allocation11 [shape = 'u8[65536]{0}', space=vmem, size = 0x10000, scoped, tag = 'input window, operand 7, single buffered']
    #allocation12 [shape = 'u8[65536]{0}', space=vmem, size = 0x10000, scoped, tag = 'input window, operand 8, single buffered']
    #allocation13 [shape = 's32[1]{0}', space=sflag, size = 0x4, scoped, tag = 'scoped memory for rnn_decoder_forward.1']
    #allocation14 [shape = 'u8[512]{0}', space=vmem, size = 0x400, scoped, tag = 'input window, operand 9, single buffered']
    #allocation15 [shape = 'u8[2048]{0}', space=vmem, size = 0x800, scoped, tag = 'output window, operand 0, single buffered']
    %15 = vsyncpa [#allocation4], 0
    %16 = vsyncpa [#allocation7], 0
    %17 = vsyncpa [#allocation10], 0
    %18 = vsyncpa [#allocation13], 0
    %19 = vsyncpa [#allocation5], 0
    // Predicated region
    $region2: #{rnn_decoder_forward.1} parent=1 // pred_check
      _
    $region3: #{rnn_decoder_forward.1} parent=1 // pred_check_branch
      %21 = sbr.rel (0) target = $region5
    $region4: #{rnn_decoder_forward.1} parent=1 // pred_region
      %s23 = ssub.s32 512, 512
      %24 = vsyncadd [#allocation4], %s23
      %s25 = sshll.u32 [#allocation3], 4
      %s26 = int_to_ptr.vmem [resolvable:$true] %s25
      %31 = dma.hbm_to_vmem [thread:$0]  %s0, 512, %s26, [#allocation4], 128, 128, 8
    $region5: #{rnn_decoder_forward.1} parent=1 // pred_fallthru
      _
    // Predicated region
    $region6: #{rnn_decoder_forward.1} parent=1 // pred_check
      _
    $region7: #{rnn_decoder_forward.1} parent=1 // pred_check_branch
      %33 = sbr.rel (0) target = $region9
    $region8: #{rnn_decoder_forward.1} parent=1 // pred_region
      %s35 = ssub.s32 64, 64
      %36 = vsyncadd [#allocation7], %s35
      %s38 = sshll.u32 [#allocation6], 4
      %s39 = int_to_ptr.vmem [resolvable:$true] %s38
      %41 = dma.hbm_to_vmem [thread:$0]  %s1, 64, %s39, [#allocation7]
    $region9: #{rnn_decoder_forward.1} parent=1 // pred_fallthru
      _
    // Predicated region
    $region10: #{rnn_decoder_forward.1} parent=1 // pred_check
      _
    $region11: #{rnn_decoder_forward.1} parent=1 // pred_check_branch
      %43 = sbr.rel (0) target = $region13
    $region12: #{rnn_decoder_forward.1} parent=1 // pred_region
      %s45 = ssub.s32 384, 384
      %46 = vsyncadd [#allocation7], %s45
      %s47 = sshll.u32 [#allocation8], 4
      %s48 = int_to_ptr.vmem [resolvable:$true] %s47
      %53 = dma.hbm_to_vmem [thread:$0]  %s2, 384, %s48, [#allocation7], 128, 128, 8
    $region13: #{rnn_decoder_forward.1} parent=1 // pred_fallthru
      _
    // Predicated region
    $region14: #{rnn_decoder_forward.1} parent=1 // pred_check
      _
    $region15: #{rnn_decoder_forward.1} parent=1 // pred_check_branch
      %55 = sbr.rel (0) target = $region17
    $region16: #{rnn_decoder_forward.1} parent=1 // pred_region
      _
    $region17: #{rnn_decoder_forward.1} parent=1 // pred_fallthru
      _
    // Predicated region
    $region18: #{rnn_decoder_forward.1} parent=1 // pred_check
      _
    $region19: #{rnn_decoder_forward.1} parent=1 // pred_check_branch
      %57 = sbr.rel (0) target = $region21
    $region20: #{rnn_decoder_forward.1} parent=1 // pred_region
      _
    $region21: #{rnn_decoder_forward.1} parent=1 // pred_fallthru
      _
    // Predicated region
    $region22: #{rnn_decoder_forward.1} parent=1 // pred_check
      _
    $region23: #{rnn_decoder_forward.1} parent=1 // pred_check_branch
      %59 = sbr.rel (0) target = $region25
    $region24: #{rnn_decoder_forward.1} parent=1 // pred_region
      %s61 = ssub.s32 4096, 4096
      %62 = vsyncadd [#allocation10], %s61
      %s63 = sshll.u32 [#allocation9], 4
      %s64 = int_to_ptr.vmem [resolvable:$true] %s63
      %69 = dma.hbm_to_vmem [thread:$0]  %s5, 4096, %s64, [#allocation10], 128, 128, 8
    $region25: #{rnn_decoder_forward.1} parent=1 // pred_fallthru
      _
    // Predicated region
    $region26: #{rnn_decoder_forward.1} parent=1 // pred_check
      _
    $region27: #{rnn_decoder_forward.1} parent=1 // pred_check_branch
      %71 = sbr.rel (0) target = $region29
    $region28: #{rnn_decoder_forward.1} parent=1 // pred_region
      _
    $region29: #{rnn_decoder_forward.1} parent=1 // pred_fallthru
      _
    // Predicated region
    $region30: #{rnn_decoder_forward.1} parent=1 // pred_check
      _
    $region31: #{rnn_decoder_forward.1} parent=1 // pred_check_branch
      %73 = sbr.rel (0) target = $region33
    $region32: #{rnn_decoder_forward.1} parent=1 // pred_region
      %s75 = ssub.s32 2048, 2048
      %76 = vsyncadd [#allocation10], %s75
      %s77 = sshll.u32 [#allocation11], 4
      %s78 = int_to_ptr.vmem [resolvable:$true] %s77
      %83 = dma.hbm_to_vmem [thread:$0]  %s7, 2048, %s78, [#allocation10], 128, 128, 8
    $region33: #{rnn_decoder_forward.1} parent=1 // pred_fallthru
      _
    // Predicated region
    $region34: #{rnn_decoder_forward.1} parent=1 // pred_check
      _
    $region35: #{rnn_decoder_forward.1} parent=1 // pred_check_branch
      %85 = sbr.rel (0) target = $region37
    $region36: #{rnn_decoder_forward.1} parent=1 // pred_region
      %s87 = ssub.s32 2048, 2048
      %88 = vsyncadd [#allocation13], %s87
      %s89 = sshll.u32 [#allocation12], 4
      %s90 = int_to_ptr.vmem [resolvable:$true] %s89
      %95 = dma.hbm_to_vmem [thread:$0]  %s8, 2048, %s90, [#allocation13], 128, 128, 8
    $region37: #{rnn_decoder_forward.1} parent=1 // pred_fallthru
      _
    // Predicated region
    $region38: #{rnn_decoder_forward.1} parent=1 // pred_check
      _
    $region39: #{rnn_decoder_forward.1} parent=1 // pred_check_branch
      %97 = sbr.rel (0) target = $region41
    $region40: #{rnn_decoder_forward.1} parent=1 // pred_region
      %s99 = ssub.s32 16, 16
      %100 = vsyncadd [#allocation13], %s99
      %s102 = sshll.u32 [#allocation14], 4
      %s103 = int_to_ptr.vmem [resolvable:$true] %s102
      %105 = dma.hbm_to_vmem [thread:$0]  %s9, 16, %s103, [#allocation13]
    $region41: #{rnn_decoder_forward.1} parent=1 // pred_fallthru
      _
    // Predicated region
    $region42: #{rnn_decoder_forward.1} parent=1 // pred_check
      _
    $region43: #{rnn_decoder_forward.1} parent=1 // pred_check_branch
      %107 = sbr.rel (0) target = $region45
    $region44: #{rnn_decoder_forward.1} parent=1 // pred_region
      %108 = dma.done [#allocation4], 512
    $region45: #{rnn_decoder_forward.1} parent=1 // pred_fallthru
      _
    // Predicated region
    $region46: #{rnn_decoder_forward.1} parent=1 // pred_check
      _
    $region47: #{rnn_decoder_forward.1} parent=1 // pred_check_branch
      %110 = sbr.rel (0) target = $region49
    $region48: #{rnn_decoder_forward.1} parent=1 // pred_region
      %111 = dma.done [#allocation7], 64
    $region49: #{rnn_decoder_forward.1} parent=1 // pred_fallthru
      _
    // Predicated region
    $region50: #{rnn_decoder_forward.1} parent=1 // pred_check
      _
    $region51: #{rnn_decoder_forward.1} parent=1 // pred_check_branch
      %113 = sbr.rel (0) target = $region53
    $region52: #{rnn_decoder_forward.1} parent=1 // pred_region
      %114 = dma.done [#allocation7], 384
    $region53: #{rnn_decoder_forward.1} parent=1 // pred_fallthru
      _
    // Predicated region
    $region54: #{rnn_decoder_forward.1} parent=1 // pred_check
      _
    $region55: #{rnn_decoder_forward.1} parent=1 // pred_check_branch
      %116 = sbr.rel (0) target = $region57
    $region56: #{rnn_decoder_forward.1} parent=1 // pred_region
      %117 = dma.done [#allocation10], 4096
    $region57: #{rnn_decoder_forward.1} parent=1 // pred_fallthru
      _
    // Predicated region
    $region58: #{rnn_decoder_forward.1} parent=1 // pred_check
      _
    $region59: #{rnn_decoder_forward.1} parent=1 // pred_check_branch
      %119 = sbr.rel (0) target = $region61
    $region60: #{rnn_decoder_forward.1} parent=1 // pred_region
      %120 = dma.done [#allocation10], 2048
    $region61: #{rnn_decoder_forward.1} parent=1 // pred_fallthru
      _
    // Predicated region
    $region62: #{rnn_decoder_forward.1} parent=1 // pred_check
      _
    $region63: #{rnn_decoder_forward.1} parent=1 // pred_check_branch
      %122 = sbr.rel (0) target = $region65
    $region64: #{rnn_decoder_forward.1} parent=1 // pred_region
      %123 = dma.done [#allocation13], 2048
    $region65: #{rnn_decoder_forward.1} parent=1 // pred_fallthru
      _
    // Predicated region
    $region66: #{rnn_decoder_forward.1} parent=1 // pred_check
      _
    $region67: #{rnn_decoder_forward.1} parent=1 // pred_check_branch
      %125 = sbr.rel (0) target = $region69
    $region68: #{rnn_decoder_forward.1} parent=1 // pred_region
      %126 = dma.done [#allocation13], 16
    $region69: #{rnn_decoder_forward.1} parent=1 // pred_fallthru
      _
    %v127 = vld [vmem:[#allocation3] sm:$0xff]
    %v128 = vld [vmem:[#allocation3 + $0x8] sm:$0xff]
    %v129 = vld [vmem:[#allocation3 + $0x10] sm:$0xff]
    %v130 = vld [vmem:[#allocation3 + $0x18] sm:$0xff]
    %v131 = vld [vmem:[#allocation8] sm:$0xff]
    %v132 = vld [vmem:[#allocation8 + $0x8] sm:$0xff]
    %v133 = vld [vmem:[#allocation8 + $0x10] sm:$0xff]
    %v134 = vld [vmem:[%s3] sm:$0x1]
    %v136 = vlaneseq
    %v137 = vshrl.u32 %v136, 7
    %v138 = vsub.s32 0, %v137
    %v139 = vrot.slane %v134, %v138
    %vm141 = vcmask 195584
    %v143 = vsel %vm141, %v127, 0
    %v146 = vsel %vm141, %v128, 0
    %v149 = vsel %vm141, %v129, 0
    %v152 = vsel %vm141, %v130, 0
    %154 = vmatprep.subr.mxu0 0.0
    %155 = vmatpush1.msra.mxu0 %v131
    %156 = vmatprep.subr.mxu0 0.0
    %157 = vmatpush1.msra.mxu0 %v132
    %158 = vmatprep.subr.mxu0 0.0
    %159 = vmatpush1.msra.mxu0 %v133
    %160 = vmatprep.subr.mxu0 0.0
    %161 = vmatpush1.msra.mxu0 0.0
    %162 = vmatprep.subr.mxu0 0.0
    %163 = vmatpush1.msra.mxu0 0.0
    %164 = vmatprep.subr.mxu0 0.0
    %165 = vmatpush1.msra.mxu0 0.0
    %166 = vmatprep.subr.mxu0 0.0
    %167 = vmatpush1.msra.mxu0 0.0
    %168 = vmatprep.subr.mxu0 0.0
    %169 = vmatpush1.msra.mxu0 0.0
    %170 = vmatprep.subr.mxu0 0.0
    %171 = vmatpush1.msra.mxu0 0.0
    %172 = vmatprep.subr.mxu0 0.0
    %173 = vmatpush1.msra.mxu0 0.0
    %174 = vmatprep.subr.mxu0 0.0
    %175 = vmatpush1.msra.mxu0 0.0
    %176 = vmatprep.subr.mxu0 0.0
    %177 = vmatpush1.msra.mxu0 0.0
    %178 = vmatprep.subr.mxu0 0.0
    %179 = vmatpush1.msra.mxu0 0.0
    %180 = vmatprep.subr.mxu0 0.0
    %181 = vmatpush1.msra.mxu0 0.0
    %182 = vmatprep.subr.mxu0 0.0
    %183 = vmatpush1.msra.mxu0 0.0
    %184 = vmatprep.subr.mxu0 0.0
    %185 = vmatpush1.msra.mxu0 0.0
    %186 = vmatprep.subr.mxu0 0.0
    %187 = vmatpush1.msra.mxu0 0.0
    %188 = vmatprep.subr.mxu0 0.0
    %189 = vmatpush1.msra.mxu0 0.0
    %190 = vmatprep.subr.mxu0 0.0
    %191 = vmatpush1.msra.mxu0 0.0
    %192 = vmatprep.subr.mxu0 0.0
    %193 = vmatpush1.msra.mxu0 0.0
    %194 = vmatprep.subr.mxu0 0.0
    %195 = vmatpush1.msra.mxu0 0.0
    %196 = vmatprep.subr.mxu0 0.0
    %197 = vmatpush1.msra.mxu0 0.0
    %198 = vmatprep.subr.mxu0 0.0
    %199 = vmatpush1.msra.mxu0 0.0
    %200 = vmatprep.subr.mxu0 0.0
    %201 = vmatpush1.msra.mxu0 0.0
    %202 = vmatprep.subr.mxu0 0.0
    %203 = vmatpush1.msra.mxu0 0.0
    %204 = vmatprep.subr.mxu0 0.0
    %205 = vmatpush1.msra.mxu0 0.0
    %206 = vmatprep.subr.mxu0 0.0
    %207 = vmatpush1.msra.mxu0 0.0
    %208 = vmatprep.subr.mxu0 0.0
    %209 = vmatpush1.msra.mxu0 0.0
    %210 = vmatprep.subr.mxu0 0.0
    %211 = vmatpush1.msra.mxu0 0.0
    %212 = vmatprep.subr.mxu0 0.0
    %213 = vmatpush1.msra.mxu0 0.0
    %214 = vmatprep.subr.mxu0 0.0
    %215 = vmatpush1.msra.mxu0 0.0
    %216 = vmatprep.subr.mxu0 0.0
    %217 = vmatpush1.msra.mxu0 0.0
    %218 = vmatprep.mubr.f32.mxu0 0.0
    %219 = vmatmul.mubr.f32.gmra.mrb[0].mxu0 %v143
    %v220 = vpop.f32.mrb[0].mxu0
    %v221 = vadd.f32 %v139, %v220
    %v222 = vpop.f32.mrb[0].mxu0
    %223 = vmatprep.mubr.f32.mxu0 0.0
    %224 = vmatmul.mubr.f32.gmra.mrb[0].mxu0 %v146
    %v225 = vpop.f32.mrb[0].mxu0
    %v226 = vadd.f32 %v139, %v225
    %v227 = vpop.f32.mrb[0].mxu0
    %228 = vmatprep.mubr.f32.mxu0 0.0
    %229 = vmatmul.mubr.f32.gmra.mrb[0].mxu0 %v149
    %v230 = vpop.f32.mrb[0].mxu0
    %v231 = vadd.f32 %v139, %v230
    %v232 = vpop.f32.mrb[0].mxu0
    %233 = vmatprep.mubr.f32.mxu0 0.0
    %234 = vmatmul.mubr.f32.gmra.mrb[0].mxu0 %v152
    %v235 = vpop.f32.mrb[0].mxu0
    %v236 = vadd.f32 %v139, %v235
    %v237 = vpop.f32.mrb[0].mxu0
    %238 = vdwg.mxu0
    %v239 = vld [vmem:[%s4] sm:$0xff]
    %v240 = vld [vmem:[%s4 + $0x8] sm:$0xff]
    %v241 = vld [vmem:[%s4 + $0x10] sm:$0xff]
    %v242 = vld [vmem:[%s4 + $0x18] sm:$0xff]
    %vm243 = vcmask 261120
    %v245 = vsel %vm243, 0.0, 0
    %247 = vmatprep.subr.mxu0 0.0
    %248 = vmatpush1.msra.mxu0 %v239
    %249 = vmatprep.subr.mxu0 0.0
    %250 = vmatpush1.msra.mxu0 %v240
    %251 = vmatprep.subr.mxu0 0.0
    %252 = vmatpush1.msra.mxu0 %v241
    %253 = vmatprep.subr.mxu0 0.0
    %254 = vmatpush1.msra.mxu0 %v242
    %255 = vmatprep.subr.mxu0 0.0
    %256 = vmatpush1.msra.mxu0 0.0
    %257 = vmatprep.subr.mxu0 0.0
    %258 = vmatpush1.msra.mxu0 0.0
    %259 = vmatprep.subr.mxu0 0.0
    %260 = vmatpush1.msra.mxu0 0.0
    %261 = vmatprep.subr.mxu0 0.0
    %262 = vmatpush1.msra.mxu0 0.0
    %263 = vmatprep.subr.mxu0 0.0
    %264 = vmatpush1.msra.mxu0 0.0
    %265 = vmatprep.subr.mxu0 0.0
    %266 = vmatpush1.msra.mxu0 0.0
    %267 = vmatprep.subr.mxu0 0.0
    %268 = vmatpush1.msra.mxu0 0.0
    %269 = vmatprep.subr.mxu0 0.0
    %270 = vmatpush1.msra.mxu0 0.0
    %271 = vmatprep.subr.mxu0 0.0
    %272 = vmatpush1.msra.mxu0 0.0
    %273 = vmatprep.subr.mxu0 0.0
    %274 = vmatpush1.msra.mxu0 0.0
    %275 = vmatprep.subr.mxu0 0.0
    %276 = vmatpush1.msra.mxu0 0.0
    %277 = vmatprep.subr.mxu0 0.0
    %278 = vmatpush1.msra.mxu0 0.0
    %279 = vmatprep.subr.mxu0 0.0
    %280 = vmatpush1.msra.mxu0 0.0
    %281 = vmatprep.subr.mxu0 0.0
    %282 = vmatpush1.msra.mxu0 0.0
    %283 = vmatprep.subr.mxu0 0.0
    %284 = vmatpush1.msra.mxu0 0.0
    %285 = vmatprep.subr.mxu0 0.0
    %286 = vmatpush1.msra.mxu0 0.0
    %287 = vmatprep.subr.mxu0 0.0
    %288 = vmatpush1.msra.mxu0 0.0
    %289 = vmatprep.subr.mxu0 0.0
    %290 = vmatpush1.msra.mxu0 0.0
    %291 = vmatprep.subr.mxu0 0.0
    %292 = vmatpush1.msra.mxu0 0.0
    %293 = vmatprep.subr.mxu0 0.0
    %294 = vmatpush1.msra.mxu0 0.0
    %295 = vmatprep.subr.mxu0 0.0
    %296 = vmatpush1.msra.mxu0 0.0
    %297 = vmatprep.subr.mxu0 0.0
    %298 = vmatpush1.msra.mxu0 0.0
    %299 = vmatprep.subr.mxu0 0.0
    %300 = vmatpush1.msra.mxu0 0.0
    %301 = vmatprep.subr.mxu0 0.0
    %302 = vmatpush1.msra.mxu0 0.0
    %303 = vmatprep.subr.mxu0 0.0
    %304 = vmatpush1.msra.mxu0 0.0
    %305 = vmatprep.subr.mxu0 0.0
    %306 = vmatpush1.msra.mxu0 0.0
    %307 = vmatprep.subr.mxu0 0.0
    %308 = vmatpush1.msra.mxu0 0.0
    %309 = vmatprep.subr.mxu0 0.0
    %310 = vmatpush1.msra.mxu0 0.0
    %311 = vmatprep.mubr.f32.mxu0 0.0
    %312 = vmatmul.mubr.f32.gmra.mrb[0].mxu0 %v245
    %v313 = vpop.f32.mrb[0].mxu0
    %v314 = vadd.f32 0.0, %v313
    %v315 = vpop.f32.mrb[0].mxu0
    %316 = vdwg.mxu0
    %v317 = vadd.f32 %v221, %v314
    %v318 = vxor.u32 %v317, 2147483648
    %v319 = vmul.f32 %v318, 1.442695
    %v320 = vpow.pop %v319
    %v321 = vadd.f32 %v320, 1.0
    %v322 = vrcp.pop %v321
    %v323 = vmul.f32 1.0, %v322
    %v324 = vtanh.pop %v317
    %v325 = vmul.f32 %v323, 0.0
    %327 = vrot.lane.b32.xlu0 %v324, 64
    %v328 = vpop.permute.xlu0 %327
    %v330 = vmul.f32 %v323, %v328
    %332 = vrot.lane.b32.xlu0 %v330, 32
    %v333 = vpop.permute.xlu0 %332
    %v335 = vadd.f32 %v325, %v333
    %v336 = vtanh.pop %v335
    %338 = vrot.lane.b32.xlu0 %v336, 64
    %v339 = vpop.permute.xlu0 %338
    %v341 = vmul.f32 %v323, %v339
    %343 = vrot.lane.b32.xlu0 %v341, 32
    %v344 = vpop.permute.xlu0 %343
    %346 = vst.msk [vmem:[#allocation2] sm:$0xff] %vm243, %v344
    %v347 = vsel %vm243, %v344, 0
    %349 = vmatprep.subr.mxu0 0.0
    %350 = vmatpush1.msra.mxu0 %v239
    %351 = vmatprep.subr.mxu0 0.0
    %352 = vmatpush1.msra.mxu0 %v240
    %353 = vmatprep.subr.mxu0 0.0
    %354 = vmatpush1.msra.mxu0 %v241
    %355 = vmatprep.subr.mxu0 0.0
    %356 = vmatpush1.msra.mxu0 %v242
    %357 = vmatprep.subr.mxu0 0.0
    %358 = vmatpush1.msra.mxu0 0.0
    %359 = vmatprep.subr.mxu0 0.0
    %360 = vmatpush1.msra.mxu0 0.0
    %361 = vmatprep.subr.mxu0 0.0
    %362 = vmatpush1.msra.mxu0 0.0
    %363 = vmatprep.subr.mxu0 0.0
    %364 = vmatpush1.msra.mxu0 0.0
    %365 = vmatprep.subr.mxu0 0.0
    %366 = vmatpush1.msra.mxu0 0.0
    %367 = vmatprep.subr.mxu0 0.0
    %368 = vmatpush1.msra.mxu0 0.0
    %369 = vmatprep.subr.mxu0 0.0
    %370 = vmatpush1.msra.mxu0 0.0
    %371 = vmatprep.subr.mxu0 0.0
    %372 = vmatpush1.msra.mxu0 0.0
    %373 = vmatprep.subr.mxu0 0.0
    %374 = vmatpush1.msra.mxu0 0.0
    %375 = vmatprep.subr.mxu0 0.0
    %376 = vmatpush1.msra.mxu0 0.0
    %377 = vmatprep.subr.mxu0 0.0
    %378 = vmatpush1.msra.mxu0 0.0
    %379 = vmatprep.subr.mxu0 0.0
    %380 = vmatpush1.msra.mxu0 0.0
    %381 = vmatprep.subr.mxu0 0.0
    %382 = vmatpush1.msra.mxu0 0.0
    %383 = vmatprep.subr.mxu0 0.0
    %384 = vmatpush1.msra.mxu0 0.0
    %385 = vmatprep.subr.mxu0 0.0
    %386 = vmatpush1.msra.mxu0 0.0
    %387 = vmatprep.subr.mxu0 0.0
    %388 = vmatpush1.msra.mxu0 0.0
    %389 = vmatprep.subr.mxu0 0.0
    %390 = vmatpush1.msra.mxu0 0.0
    %391 = vmatprep.subr.mxu0 0.0
    %392 = vmatpush1.msra.mxu0 0.0
    %393 = vmatprep.subr.mxu0 0.0
    %394 = vmatpush1.msra.mxu0 0.0
    %395 = vmatprep.subr.mxu0 0.0
    %396 = vmatpush1.msra.mxu0 0.0
    %397 = vmatprep.subr.mxu0 0.0
    %398 = vmatpush1.msra.mxu0 0.0
    %399 = vmatprep.subr.mxu0 0.0
    %400 = vmatpush1.msra.mxu0 0.0
    %401 = vmatprep.subr.mxu0 0.0
    %402 = vmatpush1.msra.mxu0 0.0
    %403 = vmatprep.subr.mxu0 0.0
    %404 = vmatpush1.msra.mxu0 0.0
    %405 = vmatprep.subr.mxu0 0.0
    %406 = vmatpush1.msra.mxu0 0.0
    %407 = vmatprep.subr.mxu0 0.0
    %408 = vmatpush1.msra.mxu0 0.0
    %409 = vmatprep.subr.mxu0 0.0
    %410 = vmatpush1.msra.mxu0 0.0
    %411 = vmatprep.subr.mxu0 0.0
    %412 = vmatpush1.msra.mxu0 0.0
    %413 = vmatprep.mubr.f32.mxu0 0.0
    %414 = vmatmul.mubr.f32.gmra.mrb[0].mxu0 %v347
    %v415 = vpop.f32.mrb[0].mxu0
    %v416 = vadd.f32 0.0, %v415
    %v417 = vpop.f32.mrb[0].mxu0
    %418 = vdwg.mxu0
    %v419 = vadd.f32 %v226, %v416
    %v420 = vxor.u32 %v419, 2147483648
    %v421 = vmul.f32 %v420, 1.442695
    %v422 = vpow.pop %v421
    %v423 = vadd.f32 %v422, 1.0
    %v424 = vrcp.pop %v423
    %v425 = vmul.f32 1.0, %v424
    %v426 = vtanh.pop %v419
    %v427 = vmul.f32 %v425, %v335
    %429 = vrot.lane.b32.xlu0 %v426, 64
    %v430 = vpop.permute.xlu0 %429
    %v432 = vmul.f32 %v425, %v430
    %434 = vrot.lane.b32.xlu0 %v432, 32
    %v435 = vpop.permute.xlu0 %434
    %v437 = vadd.f32 %v427, %v435
    %v438 = vtanh.pop %v437
    %440 = vrot.lane.b32.xlu0 %v438, 64
    %v441 = vpop.permute.xlu0 %440
    %v443 = vmul.f32 %v425, %v441
    %445 = vrot.lane.b32.xlu0 %v443, 32
    %v446 = vpop.permute.xlu0 %445
    %s448 = scalar_lea.vmem [#allocation2], 8
    %449 = vst.msk [vmem:[%s448] sm:$0xff] %vm243, %v446
    %v450 = vsel %vm243, %v446, 0
    %452 = vmatprep.subr.mxu0 0.0
    %453 = vmatpush1.msra.mxu0 %v239
    %454 = vmatprep.subr.mxu0 0.0
    %455 = vmatpush1.msra.mxu0 %v240
    %456 = vmatprep.subr.mxu0 0.0
    %457 = vmatpush1.msra.mxu0 %v241
    %458 = vmatprep.subr.mxu0 0.0
    %459 = vmatpush1.msra.mxu0 %v242
    %460 = vmatprep.subr.mxu0 0.0
    %461 = vmatpush1.msra.mxu0 0.0
    %462 = vmatprep.subr.mxu0 0.0
    %463 = vmatpush1.msra.mxu0 0.0
    %464 = vmatprep.subr.mxu0 0.0
    %465 = vmatpush1.msra.mxu0 0.0
    %466 = vmatprep.subr.mxu0 0.0
    %467 = vmatpush1.msra.mxu0 0.0
    %468 = vmatprep.subr.mxu0 0.0
    %469 = vmatpush1.msra.mxu0 0.0
    %470 = vmatprep.subr.mxu0 0.0
    %471 = vmatpush1.msra.mxu0 0.0
    %472 = vmatprep.subr.mxu0 0.0
    %473 = vmatpush1.msra.mxu0 0.0
    %474 = vmatprep.subr.mxu0 0.0
    %475 = vmatpush1.msra.mxu0 0.0
    %476 = vmatprep.subr.mxu0 0.0
    %477 = vmatpush1.msra.mxu0 0.0
    %478 = vmatprep.subr.mxu0 0.0
    %479 = vmatpush1.msra.mxu0 0.0
    %480 = vmatprep.subr.mxu0 0.0
    %481 = vmatpush1.msra.mxu0 0.0
    %482 = vmatprep.subr.mxu0 0.0
    %483 = vmatpush1.msra.mxu0 0.0
    %484 = vmatprep.subr.mxu0 0.0
    %485 = vmatpush1.msra.mxu0 0.0
    %486 = vmatprep.subr.mxu0 0.0
    %487 = vmatpush1.msra.mxu0 0.0
    %488 = vmatprep.subr.mxu0 0.0
    %489 = vmatpush1.msra.mxu0 0.0
    %490 = vmatprep.subr.mxu0 0.0
    %491 = vmatpush1.msra.mxu0 0.0
    %492 = vmatprep.subr.mxu0 0.0
    %493 = vmatpush1.msra.mxu0 0.0
    %494 = vmatprep.subr.mxu0 0.0
    %495 = vmatpush1.msra.mxu0 0.0
    %496 = vmatprep.subr.mxu0 0.0
    %497 = vmatpush1.msra.mxu0 0.0
    %498 = vmatprep.subr.mxu0 0.0
    %499 = vmatpush1.msra.mxu0 0.0
    %500 = vmatprep.subr.mxu0 0.0
    %501 = vmatpush1.msra.mxu0 0.0
    %502 = vmatprep.subr.mxu0 0.0
    %503 = vmatpush1.msra.mxu0 0.0
    %504 = vmatprep.subr.mxu0 0.0
    %505 = vmatpush1.msra.mxu0 0.0
    %506 = vmatprep.subr.mxu0 0.0
    %507 = vmatpush1.msra.mxu0 0.0
    %508 = vmatprep.subr.mxu0 0.0
    %509 = vmatpush1.msra.mxu0 0.0
    %510 = vmatprep.subr.mxu0 0.0
    %511 = vmatpush1.msra.mxu0 0.0
    %512 = vmatprep.subr.mxu0 0.0
    %513 = vmatpush1.msra.mxu0 0.0
    %514 = vmatprep.subr.mxu0 0.0
    %515 = vmatpush1.msra.mxu0 0.0
    %516 = vmatprep.mubr.f32.mxu0 0.0
    %517 = vmatmul.mubr.f32.gmra.mrb[0].mxu0 %v450
    %v518 = vpop.f32.mrb[0].mxu0
    %v519 = vadd.f32 0.0, %v518
    %v520 = vpop.f32.mrb[0].mxu0
    %521 = vdwg.mxu0
    %v522 = vadd.f32 %v231, %v519
    %v523 = vxor.u32 %v522, 2147483648
    %v524 = vmul.f32 %v523, 1.442695
    %v525 = vpow.pop %v524
    %v526 = vadd.f32 %v525, 1.0
    %v527 = vrcp.pop %v526
    %v528 = vmul.f32 1.0, %v527
    %v529 = vtanh.pop %v522
    %v530 = vmul.f32 %v528, %v437
    %532 = vrot.lane.b32.xlu0 %v529, 64
    %v533 = vpop.permute.xlu0 %532
    %v535 = vmul.f32 %v528, %v533
    %537 = vrot.lane.b32.xlu0 %v535, 32
    %v538 = vpop.permute.xlu0 %537
    %v540 = vadd.f32 %v530, %v538
    %v541 = vtanh.pop %v540
    %543 = vrot.lane.b32.xlu0 %v541, 64
    %v544 = vpop.permute.xlu0 %543
    %v546 = vmul.f32 %v528, %v544
    %548 = vrot.lane.b32.xlu0 %v546, 32
    %v549 = vpop.permute.xlu0 %548
    %s551 = scalar_lea.vmem [#allocation2], 16
    %552 = vst.msk [vmem:[%s551] sm:$0xff] %vm243, %v549
    %v553 = vsel %vm243, %v549, 0
    %555 = vmatprep.subr.mxu0 0.0
    %556 = vmatpush1.msra.mxu0 %v239
    %557 = vmatprep.subr.mxu0 0.0
    %558 = vmatpush1.msra.mxu0 %v240
    %559 = vmatprep.subr.mxu0 0.0
    %560 = vmatpush1.msra.mxu0 %v241
    %561 = vmatprep.subr.mxu0 0.0
    %562 = vmatpush1.msra.mxu0 %v242
    %563 = vmatprep.subr.mxu0 0.0
    %564 = vmatpush1.msra.mxu0 0.0
    %565 = vmatprep.subr.mxu0 0.0
    %566 = vmatpush1.msra.mxu0 0.0
    %567 = vmatprep.subr.mxu0 0.0
    %568 = vmatpush1.msra.mxu0 0.0
    %569 = vmatprep.subr.mxu0 0.0
    %570 = vmatpush1.msra.mxu0 0.0
    %571 = vmatprep.subr.mxu0 0.0
    %572 = vmatpush1.msra.mxu0 0.0
    %573 = vmatprep.subr.mxu0 0.0
    %574 = vmatpush1.msra.mxu0 0.0
    %575 = vmatprep.subr.mxu0 0.0
    %576 = vmatpush1.msra.mxu0 0.0
    %577 = vmatprep.subr.mxu0 0.0
    %578 = vmatpush1.msra.mxu0 0.0
    %579 = vmatprep.subr.mxu0 0.0
    %580 = vmatpush1.msra.mxu0 0.0
    %581 = vmatprep.subr.mxu0 0.0
    %582 = vmatpush1.msra.mxu0 0.0
    %583 = vmatprep.subr.mxu0 0.0
    %584 = vmatpush1.msra.mxu0 0.0
    %585 = vmatprep.subr.mxu0 0.0
    %586 = vmatpush1.msra.mxu0 0.0
    %587 = vmatprep.subr.mxu0 0.0
    %588 = vmatpush1.msra.mxu0 0.0
    %589 = vmatprep.subr.mxu0 0.0
    %590 = vmatpush1.msra.mxu0 0.0
    %591 = vmatprep.subr.mxu0 0.0
    %592 = vmatpush1.msra.mxu0 0.0
    %593 = vmatprep.subr.mxu0 0.0
    %594 = vmatpush1.msra.mxu0 0.0
    %595 = vmatprep.subr.mxu0 0.0
    %596 = vmatpush1.msra.mxu0 0.0
    %597 = vmatprep.subr.mxu0 0.0
    %598 = vmatpush1.msra.mxu0 0.0
    %599 = vmatprep.subr.mxu0 0.0
    %600 = vmatpush1.msra.mxu0 0.0
    %601 = vmatprep.subr.mxu0 0.0
    %602 = vmatpush1.msra.mxu0 0.0
    %603 = vmatprep.subr.mxu0 0.0
    %604 = vmatpush1.msra.mxu0 0.0
    %605 = vmatprep.subr.mxu0 0.0
    %606 = vmatpush1.msra.mxu0 0.0
    %607 = vmatprep.subr.mxu0 0.0
    %608 = vmatpush1.msra.mxu0 0.0
    %609 = vmatprep.subr.mxu0 0.0
    %610 = vmatpush1.msra.mxu0 0.0
    %611 = vmatprep.subr.mxu0 0.0
    %612 = vmatpush1.msra.mxu0 0.0
    %613 = vmatprep.subr.mxu0 0.0
    %614 = vmatpush1.msra.mxu0 0.0
    %615 = vmatprep.subr.mxu0 0.0
    %616 = vmatpush1.msra.mxu0 0.0
    %617 = vmatprep.subr.mxu0 0.0
    %618 = vmatpush1.msra.mxu0 0.0
    %619 = vmatprep.mubr.f32.mxu0 0.0
    %620 = vmatmul.mubr.f32.gmra.mrb[0].mxu0 %v553
    %v621 = vpop.f32.mrb[0].mxu0
    %v622 = vadd.f32 0.0, %v621
    %v623 = vpop.f32.mrb[0].mxu0
    %624 = vdwg.mxu0
    %v625 = vadd.f32 %v236, %v622
    %v626 = vxor.u32 %v625, 2147483648
    %v627 = vmul.f32 %v626, 1.442695
    %v628 = vpow.pop %v627
    %v629 = vadd.f32 %v628, 1.0
    %v630 = vrcp.pop %v629
    %v631 = vmul.f32 1.0, %v630
    %v632 = vtanh.pop %v625
    %v633 = vmul.f32 %v631, %v540
    %635 = vrot.lane.b32.xlu0 %v632, 64
    %v636 = vpop.permute.xlu0 %635
    %v638 = vmul.f32 %v631, %v636
    %640 = vrot.lane.b32.xlu0 %v638, 32
    %v641 = vpop.permute.xlu0 %640
    %v643 = vadd.f32 %v633, %v641
    %v644 = vtanh.pop %v643
    %646 = vrot.lane.b32.xlu0 %v644, 64
    %v647 = vpop.permute.xlu0 %646
    %v649 = vmul.f32 %v631, %v647
    %651 = vrot.lane.b32.xlu0 %v649, 32
    %v652 = vpop.permute.xlu0 %651
    %s654 = scalar_lea.vmem [#allocation2], 24
    %655 = vst.msk [vmem:[%s654] sm:$0xff] %vm243, %v652
    %v656 = vld [vmem:[#allocation2] sm:$0xff]
    %v657 = vld [vmem:[#allocation2 + $0x8] sm:$0xff]
    %v658 = vld [vmem:[#allocation2 + $0x10] sm:$0xff]
    %v659 = vld [vmem:[#allocation2 + $0x18] sm:$0xff]
    %v660 = vld [vmem:[#allocation9] sm:$0xff]
    %v661 = vld [vmem:[#allocation9 + $0x8] sm:$0xff]
    %v662 = vld [vmem:[#allocation9 + $0x10] sm:$0xff]
    %v663 = vld [vmem:[#allocation9 + $0x18] sm:$0xff]
    %s664 = scalar_lea.vmem [#allocation9], 32
    %v665 = vld [vmem:[%s664] sm:$0xff]
    %v666 = vld [vmem:[%s664 + $0x8] sm:$0xff]
    %v667 = vld [vmem:[%s664 + $0x10] sm:$0xff]
    %v668 = vld [vmem:[%s664 + $0x18] sm:$0xff]
    %v673 = vrot.slane %v656, 1
    %vm674 = vcmask 1041409
    %v675 = vsel %vm674, %v657, %v673
    %v676 = vrot.slane %v658, 7
    %vm677 = vcmask 1042434
    %v678 = vsel %vm677, %v676, %v675
    %v679 = vrot.slane %v659, 6
    %vm680 = vcmask 1043459
    %v681 = vsel %vm680, %v679, %v678
    %v682 = vsel %vm243, %v681, 0
    %684 = vmatprep.subr.mxu0 0.0
    %685 = vmatpush1.msra.mxu0 %v665
    %686 = vmatprep.subr.mxu0 0.0
    %687 = vmatpush1.msra.mxu0 %v666
    %688 = vmatprep.subr.mxu0 0.0
    %689 = vmatpush1.msra.mxu0 %v667
    %690 = vmatprep.subr.mxu0 0.0
    %691 = vmatpush1.msra.mxu0 %v668
    %692 = vmatprep.subr.mxu0 0.0
    %693 = vmatpush1.msra.mxu0 0.0
    %694 = vmatprep.subr.mxu0 0.0
    %695 = vmatpush1.msra.mxu0 0.0
    %696 = vmatprep.subr.mxu0 0.0
    %697 = vmatpush1.msra.mxu0 0.0
    %698 = vmatprep.subr.mxu0 0.0
    %699 = vmatpush1.msra.mxu0 0.0
    %700 = vmatprep.subr.mxu0 0.0
    %701 = vmatpush1.msra.mxu0 0.0
    %702 = vmatprep.subr.mxu0 0.0
    %703 = vmatpush1.msra.mxu0 0.0
    %704 = vmatprep.subr.mxu0 0.0
    %705 = vmatpush1.msra.mxu0 0.0
    %706 = vmatprep.subr.mxu0 0.0
    %707 = vmatpush1.msra.mxu0 0.0
    %708 = vmatprep.subr.mxu0 0.0
    %709 = vmatpush1.msra.mxu0 0.0
    %710 = vmatprep.subr.mxu0 0.0
    %711 = vmatpush1.msra.mxu0 0.0
    %712 = vmatprep.subr.mxu0 0.0
    %713 = vmatpush1.msra.mxu0 0.0
    %714 = vmatprep.subr.mxu0 0.0
    %715 = vmatpush1.msra.mxu0 0.0
    %716 = vmatprep.subr.mxu0 0.0
    %717 = vmatpush1.msra.mxu0 0.0
    %718 = vmatprep.subr.mxu0 0.0
    %719 = vmatpush1.msra.mxu0 0.0
    %720 = vmatprep.subr.mxu0 0.0
    %721 = vmatpush1.msra.mxu0 0.0
    %722 = vmatprep.subr.mxu0 0.0
    %723 = vmatpush1.msra.mxu0 0.0
    %724 = vmatprep.subr.mxu0 0.0
    %725 = vmatpush1.msra.mxu0 0.0
    %726 = vmatprep.subr.mxu0 0.0
    %727 = vmatpush1.msra.mxu0 0.0
    %728 = vmatprep.subr.mxu0 0.0
    %729 = vmatpush1.msra.mxu0 0.0
    %730 = vmatprep.subr.mxu0 0.0
    %731 = vmatpush1.msra.mxu0 0.0
    %732 = vmatprep.subr.mxu0 0.0
    %733 = vmatpush1.msra.mxu0 0.0
    %734 = vmatprep.subr.mxu0 0.0
    %735 = vmatpush1.msra.mxu0 0.0
    %736 = vmatprep.subr.mxu0 0.0
    %737 = vmatpush1.msra.mxu0 0.0
    %738 = vmatprep.subr.mxu0 0.0
    %739 = vmatpush1.msra.mxu0 0.0
    %740 = vmatprep.subr.mxu0 0.0
    %741 = vmatpush1.msra.mxu0 0.0
    %742 = vmatprep.subr.mxu0 0.0
    %743 = vmatpush1.msra.mxu0 0.0
    %744 = vmatprep.subr.mxu0 0.0
    %745 = vmatpush1.msra.mxu0 0.0
    %746 = vmatprep.subr.mxu0 0.0
    %747 = vmatpush1.msra.mxu0 0.0
    %748 = vmatprep.mubr.f32.mxu0 0.0
    %749 = vmatmul.mubr.f32.gmra.mrb[0].mxu0 %v682
    %v750 = vpop.f32.mrb[0].mxu0
    %v751 = vadd.f32 0.0, %v750
    %v752 = vpop.f32.mrb[0].mxu0
    %753 = vdwg.mxu0
    %s754 = scalar_lea.vmem [#allocation9], 64
    %v755 = vld [vmem:[%s754] sm:$0xff]
    %v756 = vld [vmem:[%s754 + $0x8] sm:$0xff]
    %v757 = vld [vmem:[%s754 + $0x10] sm:$0xff]
    %v758 = vld [vmem:[%s754 + $0x18] sm:$0xff]
    %s759 = scalar_lea.vmem [#allocation9], 96
    %v760 = vld [vmem:[%s759] sm:$0xff]
    %v761 = vld [vmem:[%s759 + $0x8] sm:$0xff]
    %v762 = vld [vmem:[%s759 + $0x10] sm:$0xff]
    %v763 = vld [vmem:[%s759 + $0x18] sm:$0xff]
    %v764 = vrot.slane %v656, 3
    %v765 = vrot.slane %v657, 2
    %v766 = vsel %vm674, %v765, %v764
    %v767 = vrot.slane %v658, 1
    %v768 = vsel %vm677, %v767, %v766
    %v769 = vsel %vm680, %v659, %v768
    %v770 = vsel %vm243, %v769, 0
    %772 = vmatprep.subr.mxu0 0.0
    %773 = vmatpush1.msra.mxu0 %v760
    %774 = vmatprep.subr.mxu0 0.0
    %775 = vmatpush1.msra.mxu0 %v761
    %776 = vmatprep.subr.mxu0 0.0
    %777 = vmatpush1.msra.mxu0 %v762
    %778 = vmatprep.subr.mxu0 0.0
    %779 = vmatpush1.msra.mxu0 %v763
    %780 = vmatprep.subr.mxu0 0.0
    %781 = vmatpush1.msra.mxu0 0.0
    %782 = vmatprep.subr.mxu0 0.0
    %783 = vmatpush1.msra.mxu0 0.0
    %784 = vmatprep.subr.mxu0 0.0
    %785 = vmatpush1.msra.mxu0 0.0
    %786 = vmatprep.subr.mxu0 0.0
    %787 = vmatpush1.msra.mxu0 0.0
    %788 = vmatprep.subr.mxu0 0.0
    %789 = vmatpush1.msra.mxu0 0.0
    %790 = vmatprep.subr.mxu0 0.0
    %791 = vmatpush1.msra.mxu0 0.0
    %792 = vmatprep.subr.mxu0 0.0
    %793 = vmatpush1.msra.mxu0 0.0
    %794 = vmatprep.subr.mxu0 0.0
    %795 = vmatpush1.msra.mxu0 0.0
    %796 = vmatprep.subr.mxu0 0.0
    %797 = vmatpush1.msra.mxu0 0.0
    %798 = vmatprep.subr.mxu0 0.0
    %799 = vmatpush1.msra.mxu0 0.0
    %800 = vmatprep.subr.mxu0 0.0
    %801 = vmatpush1.msra.mxu0 0.0
    %802 = vmatprep.subr.mxu0 0.0
    %803 = vmatpush1.msra.mxu0 0.0
    %804 = vmatprep.subr.mxu0 0.0
    %805 = vmatpush1.msra.mxu0 0.0
    %806 = vmatprep.subr.mxu0 0.0
    %807 = vmatpush1.msra.mxu0 0.0
    %808 = vmatprep.subr.mxu0 0.0
    %809 = vmatpush1.msra.mxu0 0.0
    %810 = vmatprep.subr.mxu0 0.0
    %811 = vmatpush1.msra.mxu0 0.0
    %812 = vmatprep.subr.mxu0 0.0
    %813 = vmatpush1.msra.mxu0 0.0
    %814 = vmatprep.subr.mxu0 0.0
    %815 = vmatpush1.msra.mxu0 0.0
    %816 = vmatprep.subr.mxu0 0.0
    %817 = vmatpush1.msra.mxu0 0.0
    %818 = vmatprep.subr.mxu0 0.0
    %819 = vmatpush1.msra.mxu0 0.0
    %820 = vmatprep.subr.mxu0 0.0
    %821 = vmatpush1.msra.mxu0 0.0
    %822 = vmatprep.subr.mxu0 0.0
    %823 = vmatpush1.msra.mxu0 0.0
    %824 = vmatprep.subr.mxu0 0.0
    %825 = vmatpush1.msra.mxu0 0.0
    %826 = vmatprep.subr.mxu0 0.0
    %827 = vmatpush1.msra.mxu0 0.0
    %828 = vmatprep.subr.mxu0 0.0
    %829 = vmatpush1.msra.mxu0 0.0
    %830 = vmatprep.subr.mxu0 0.0
    %831 = vmatpush1.msra.mxu0 0.0
    %832 = vmatprep.subr.mxu0 0.0
    %833 = vmatpush1.msra.mxu0 0.0
    %834 = vmatprep.subr.mxu0 0.0
    %835 = vmatpush1.msra.mxu0 0.0
    %836 = vmatprep.mubr.f32.mxu0 0.0
    %837 = vmatmul.mubr.f32.gmra.mrb[0].mxu0 %v770
    %v838 = vpop.f32.mrb[0].mxu0
    %v839 = vadd.f32 0.0, %v838
    %v840 = vpop.f32.mrb[0].mxu0
    %841 = vdwg.mxu0
    %s842 = scalar_lea.vmem [#allocation9], 128
    %v843 = vld [vmem:[%s842] sm:$0xff]
    %v844 = vld [vmem:[%s842 + $0x8] sm:$0xff]
    %v845 = vld [vmem:[%s842 + $0x10] sm:$0xff]
    %v846 = vld [vmem:[%s842 + $0x18] sm:$0xff]
    %s847 = scalar_lea.vmem [#allocation9], 160
    %v848 = vld [vmem:[%s847] sm:$0xff]
    %v849 = vld [vmem:[%s847 + $0x8] sm:$0xff]
    %v850 = vld [vmem:[%s847 + $0x10] sm:$0xff]
    %v851 = vld [vmem:[%s847 + $0x18] sm:$0xff]
    %v852 = vrot.slane %v656, 5
    %v853 = vrot.slane %v657, 4
    %v854 = vsel %vm674, %v853, %v852
    %v855 = vrot.slane %v658, 3
    %v856 = vsel %vm677, %v855, %v854
    %v857 = vrot.slane %v659, 2
    %v858 = vsel %vm680, %v857, %v856
    %v859 = vsel %vm243, %v858, 0
    %861 = vmatprep.subr.mxu0 0.0
    %862 = vmatpush1.msra.mxu0 %v848
    %863 = vmatprep.subr.mxu0 0.0
    %864 = vmatpush1.msra.mxu0 %v849
    %865 = vmatprep.subr.mxu0 0.0
    %866 = vmatpush1.msra.mxu0 %v850
    %867 = vmatprep.subr.mxu0 0.0
    %868 = vmatpush1.msra.mxu0 %v851
    %869 = vmatprep.subr.mxu0 0.0
    %870 = vmatpush1.msra.mxu0 0.0
    %871 = vmatprep.subr.mxu0 0.0
    %872 = vmatpush1.msra.mxu0 0.0
    %873 = vmatprep.subr.mxu0 0.0
    %874 = vmatpush1.msra.mxu0 0.0
    %875 = vmatprep.subr.mxu0 0.0
    %876 = vmatpush1.msra.mxu0 0.0
    %877 = vmatprep.subr.mxu0 0.0
    %878 = vmatpush1.msra.mxu0 0.0
    %879 = vmatprep.subr.mxu0 0.0
    %880 = vmatpush1.msra.mxu0 0.0
    %881 = vmatprep.subr.mxu0 0.0
    %882 = vmatpush1.msra.mxu0 0.0
    %883 = vmatprep.subr.mxu0 0.0
    %884 = vmatpush1.msra.mxu0 0.0
    %885 = vmatprep.subr.mxu0 0.0
    %886 = vmatpush1.msra.mxu0 0.0
    %887 = vmatprep.subr.mxu0 0.0
    %888 = vmatpush1.msra.mxu0 0.0
    %889 = vmatprep.subr.mxu0 0.0
    %890 = vmatpush1.msra.mxu0 0.0
    %891 = vmatprep.subr.mxu0 0.0
    %892 = vmatpush1.msra.mxu0 0.0
    %893 = vmatprep.subr.mxu0 0.0
    %894 = vmatpush1.msra.mxu0 0.0
    %895 = vmatprep.subr.mxu0 0.0
    %896 = vmatpush1.msra.mxu0 0.0
    %897 = vmatprep.subr.mxu0 0.0
    %898 = vmatpush1.msra.mxu0 0.0
    %899 = vmatprep.subr.mxu0 0.0
    %900 = vmatpush1.msra.mxu0 0.0
    %901 = vmatprep.subr.mxu0 0.0
    %902 = vmatpush1.msra.mxu0 0.0
    %903 = vmatprep.subr.mxu0 0.0
    %904 = vmatpush1.msra.mxu0 0.0
    %905 = vmatprep.subr.mxu0 0.0
    %906 = vmatpush1.msra.mxu0 0.0
    %907 = vmatprep.subr.mxu0 0.0
    %908 = vmatpush1.msra.mxu0 0.0
    %909 = vmatprep.subr.mxu0 0.0
    %910 = vmatpush1.msra.mxu0 0.0
    %911 = vmatprep.subr.mxu0 0.0
    %912 = vmatpush1.msra.mxu0 0.0
    %913 = vmatprep.subr.mxu0 0.0
    %914 = vmatpush1.msra.mxu0 0.0
    %915 = vmatprep.subr.mxu0 0.0
    %916 = vmatpush1.msra.mxu0 0.0
    %917 = vmatprep.subr.mxu0 0.0
    %918 = vmatpush1.msra.mxu0 0.0
    %919 = vmatprep.subr.mxu0 0.0
    %920 = vmatpush1.msra.mxu0 0.0
    %921 = vmatprep.subr.mxu0 0.0
    %922 = vmatpush1.msra.mxu0 0.0
    %923 = vmatprep.subr.mxu0 0.0
    %924 = vmatpush1.msra.mxu0 0.0
    %925 = vmatprep.mubr.f32.mxu0 0.0
    %926 = vmatmul.mubr.f32.gmra.mrb[0].mxu0 %v859
    %v927 = vpop.f32.mrb[0].mxu0
    %v928 = vadd.f32 0.0, %v927
    %v929 = vpop.f32.mrb[0].mxu0
    %930 = vdwg.mxu0
    %s931 = scalar_lea.vmem [#allocation9], 192
    %v932 = vld [vmem:[%s931] sm:$0xff]
    %v933 = vld [vmem:[%s931 + $0x8] sm:$0xff]
    %v934 = vld [vmem:[%s931 + $0x10] sm:$0xff]
    %v935 = vld [vmem:[%s931 + $0x18] sm:$0xff]
    %s936 = scalar_lea.vmem [#allocation9], 224
    %v937 = vld [vmem:[%s936] sm:$0xff]
    %v938 = vld [vmem:[%s936 + $0x8] sm:$0xff]
    %v939 = vld [vmem:[%s936 + $0x10] sm:$0xff]
    %v940 = vld [vmem:[%s936 + $0x18] sm:$0xff]
    %v941 = vrot.slane %v656, 7
    %v942 = vrot.slane %v657, 6
    %v943 = vsel %vm674, %v942, %v941
    %v944 = vrot.slane %v658, 5
    %v945 = vsel %vm677, %v944, %v943
    %v946 = vrot.slane %v659, 4
    %v947 = vsel %vm680, %v946, %v945
    %v948 = vsel %vm243, %v947, 0
    %950 = vmatprep.subr.mxu0 0.0
    %951 = vmatpush1.msra.mxu0 %v937
    %952 = vmatprep.subr.mxu0 0.0
    %953 = vmatpush1.msra.mxu0 %v938
    %954 = vmatprep.subr.mxu0 0.0
    %955 = vmatpush1.msra.mxu0 %v939
    %956 = vmatprep.subr.mxu0 0.0
    %957 = vmatpush1.msra.mxu0 %v940
    %958 = vmatprep.subr.mxu0 0.0
    %959 = vmatpush1.msra.mxu0 0.0
    %960 = vmatprep.subr.mxu0 0.0
    %961 = vmatpush1.msra.mxu0 0.0
    %962 = vmatprep.subr.mxu0 0.0
    %963 = vmatpush1.msra.mxu0 0.0
    %964 = vmatprep.subr.mxu0 0.0
    %965 = vmatpush1.msra.mxu0 0.0
    %966 = vmatprep.subr.mxu0 0.0
    %967 = vmatpush1.msra.mxu0 0.0
    %968 = vmatprep.subr.mxu0 0.0
    %969 = vmatpush1.msra.mxu0 0.0
    %970 = vmatprep.subr.mxu0 0.0
    %971 = vmatpush1.msra.mxu0 0.0
    %972 = vmatprep.subr.mxu0 0.0
    %973 = vmatpush1.msra.mxu0 0.0
    %974 = vmatprep.subr.mxu0 0.0
    %975 = vmatpush1.msra.mxu0 0.0
    %976 = vmatprep.subr.mxu0 0.0
    %977 = vmatpush1.msra.mxu0 0.0
    %978 = vmatprep.subr.mxu0 0.0
    %979 = vmatpush1.msra.mxu0 0.0
    %980 = vmatprep.subr.mxu0 0.0
    %981 = vmatpush1.msra.mxu0 0.0
    %982 = vmatprep.subr.mxu0 0.0
    %983 = vmatpush1.msra.mxu0 0.0
    %984 = vmatprep.subr.mxu0 0.0
    %985 = vmatpush1.msra.mxu0 0.0
    %986 = vmatprep.subr.mxu0 0.0
    %987 = vmatpush1.msra.mxu0 0.0
    %988 = vmatprep.subr.mxu0 0.0
    %989 = vmatpush1.msra.mxu0 0.0
    %990 = vmatprep.subr.mxu0 0.0
    %991 = vmatpush1.msra.mxu0 0.0
    %992 = vmatprep.subr.mxu0 0.0
    %993 = vmatpush1.msra.mxu0 0.0
    %994 = vmatprep.subr.mxu0 0.0
    %995 = vmatpush1.msra.mxu0 0.0
    %996 = vmatprep.subr.mxu0 0.0
    %997 = vmatpush1.msra.mxu0 0.0
    %998 = vmatprep.subr.mxu0 0.0
    %999 = vmatpush1.msra.mxu0 0.0
    %1000 = vmatprep.subr.mxu0 0.0
    %1001 = vmatpush1.msra.mxu0 0.0
    %1002 = vmatprep.subr.mxu0 0.0
    %1003 = vmatpush1.msra.mxu0 0.0
    %1004 = vmatprep.subr.mxu0 0.0
    %1005 = vmatpush1.msra.mxu0 0.0
    %1006 = vmatprep.subr.mxu0 0.0
    %1007 = vmatpush1.msra.mxu0 0.0
    %1008 = vmatprep.subr.mxu0 0.0
    %1009 = vmatpush1.msra.mxu0 0.0
    %1010 = vmatprep.subr.mxu0 0.0
    %1011 = vmatpush1.msra.mxu0 0.0
    %1012 = vmatprep.subr.mxu0 0.0
    %1013 = vmatpush1.msra.mxu0 0.0
    %1014 = vmatprep.mubr.f32.mxu0 0.0
    %1015 = vmatmul.mubr.f32.gmra.mrb[0].mxu0 %v948
    %v1016 = vpop.f32.mrb[0].mxu0
    %v1017 = vadd.f32 0.0, %v1016
    %v1018 = vpop.f32.mrb[0].mxu0
    %1019 = vdwg.mxu0
    %v1020 = vrot.slane %v657, 7
    %v1021 = vsel %vm674, %v1020, %v656
    %v1022 = vrot.slane %v658, 6
    %v1023 = vsel %vm677, %v1022, %v1021
    %v1024 = vrot.slane %v659, 5
    %v1025 = vsel %vm680, %v1024, %v1023
    %v1026 = vsel %vm243, %v1025, 0
    %1028 = vmatprep.subr.mxu0 0.0
    %1029 = vmatpush1.msra.mxu0 %v660
    %1030 = vmatprep.subr.mxu0 0.0
    %1031 = vmatpush1.msra.mxu0 %v661
    %1032 = vmatprep.subr.mxu0 0.0
    %1033 = vmatpush1.msra.mxu0 %v662
    %1034 = vmatprep.subr.mxu0 0.0
    %1035 = vmatpush1.msra.mxu0 %v663
    %1036 = vmatprep.subr.mxu0 0.0
    %1037 = vmatpush1.msra.mxu0 0.0
    %1038 = vmatprep.subr.mxu0 0.0
    %1039 = vmatpush1.msra.mxu0 0.0
    %1040 = vmatprep.subr.mxu0 0.0
    %1041 = vmatpush1.msra.mxu0 0.0
    %1042 = vmatprep.subr.mxu0 0.0
    %1043 = vmatpush1.msra.mxu0 0.0
    %1044 = vmatprep.subr.mxu0 0.0
    %1045 = vmatpush1.msra.mxu0 0.0
    %1046 = vmatprep.subr.mxu0 0.0
    %1047 = vmatpush1.msra.mxu0 0.0
    %1048 = vmatprep.subr.mxu0 0.0
    %1049 = vmatpush1.msra.mxu0 0.0
    %1050 = vmatprep.subr.mxu0 0.0
    %1051 = vmatpush1.msra.mxu0 0.0
    %1052 = vmatprep.subr.mxu0 0.0
    %1053 = vmatpush1.msra.mxu0 0.0
    %1054 = vmatprep.subr.mxu0 0.0
    %1055 = vmatpush1.msra.mxu0 0.0
    %1056 = vmatprep.subr.mxu0 0.0
    %1057 = vmatpush1.msra.mxu0 0.0
    %1058 = vmatprep.subr.mxu0 0.0
    %1059 = vmatpush1.msra.mxu0 0.0
    %1060 = vmatprep.subr.mxu0 0.0
    %1061 = vmatpush1.msra.mxu0 0.0
    %1062 = vmatprep.subr.mxu0 0.0
    %1063 = vmatpush1.msra.mxu0 0.0
    %1064 = vmatprep.subr.mxu0 0.0
    %1065 = vmatpush1.msra.mxu0 0.0
    %1066 = vmatprep.subr.mxu0 0.0
    %1067 = vmatpush1.msra.mxu0 0.0
    %1068 = vmatprep.subr.mxu0 0.0
    %1069 = vmatpush1.msra.mxu0 0.0
    %1070 = vmatprep.subr.mxu0 0.0
    %1071 = vmatpush1.msra.mxu0 0.0
    %1072 = vmatprep.subr.mxu0 0.0
    %1073 = vmatpush1.msra.mxu0 0.0
    %1074 = vmatprep.subr.mxu0 0.0
    %1075 = vmatpush1.msra.mxu0 0.0
    %1076 = vmatprep.subr.mxu0 0.0
    %1077 = vmatpush1.msra.mxu0 0.0
    %1078 = vmatprep.subr.mxu0 0.0
    %1079 = vmatpush1.msra.mxu0 0.0
    %1080 = vmatprep.subr.mxu0 0.0
    %1081 = vmatpush1.msra.mxu0 0.0
    %1082 = vmatprep.subr.mxu0 0.0
    %1083 = vmatpush1.msra.mxu0 0.0
    %1084 = vmatprep.subr.mxu0 0.0
    %1085 = vmatpush1.msra.mxu0 0.0
    %1086 = vmatprep.subr.mxu0 0.0
    %1087 = vmatpush1.msra.mxu0 0.0
    %1088 = vmatprep.subr.mxu0 0.0
    %1089 = vmatpush1.msra.mxu0 0.0
    %1090 = vmatprep.subr.mxu0 0.0
    %1091 = vmatpush1.msra.mxu0 0.0
    %1092 = vmatprep.mubr.f32.mxu0 0.0
    %1093 = vmatmul.mubr.f32.gmra.mrb[0].mxu0 %v1026
    %v1094 = vpop.f32.mrb[0].mxu0
    %v1095 = vadd.f32 %v751, %v1094
    %v1096 = vpop.f32.mrb[0].mxu0
    %1097 = vdwg.mxu0
    %v1098 = vrot.slane %v656, 2
    %v1099 = vrot.slane %v657, 1
    %v1100 = vsel %vm674, %v1099, %v1098
    %v1101 = vsel %vm677, %v658, %v1100
    %v1102 = vrot.slane %v659, 7
    %v1103 = vsel %vm680, %v1102, %v1101
    %v1104 = vsel %vm243, %v1103, 0
    %1106 = vmatprep.subr.mxu0 0.0
    %1107 = vmatpush1.msra.mxu0 %v755
    %1108 = vmatprep.subr.mxu0 0.0
    %1109 = vmatpush1.msra.mxu0 %v756
    %1110 = vmatprep.subr.mxu0 0.0
    %1111 = vmatpush1.msra.mxu0 %v757
    %1112 = vmatprep.subr.mxu0 0.0
    %1113 = vmatpush1.msra.mxu0 %v758
    %1114 = vmatprep.subr.mxu0 0.0
    %1115 = vmatpush1.msra.mxu0 0.0
    %1116 = vmatprep.subr.mxu0 0.0
    %1117 = vmatpush1.msra.mxu0 0.0
    %1118 = vmatprep.subr.mxu0 0.0
    %1119 = vmatpush1.msra.mxu0 0.0
    %1120 = vmatprep.subr.mxu0 0.0
    %1121 = vmatpush1.msra.mxu0 0.0
    %1122 = vmatprep.subr.mxu0 0.0
    %1123 = vmatpush1.msra.mxu0 0.0
    %1124 = vmatprep.subr.mxu0 0.0
    %1125 = vmatpush1.msra.mxu0 0.0
    %1126 = vmatprep.subr.mxu0 0.0
    %1127 = vmatpush1.msra.mxu0 0.0
    %1128 = vmatprep.subr.mxu0 0.0
    %1129 = vmatpush1.msra.mxu0 0.0
    %1130 = vmatprep.subr.mxu0 0.0
    %1131 = vmatpush1.msra.mxu0 0.0
    %1132 = vmatprep.subr.mxu0 0.0
    %1133 = vmatpush1.msra.mxu0 0.0
    %1134 = vmatprep.subr.mxu0 0.0
    %1135 = vmatpush1.msra.mxu0 0.0
    %1136 = vmatprep.subr.mxu0 0.0
    %1137 = vmatpush1.msra.mxu0 0.0
    %1138 = vmatprep.subr.mxu0 0.0
    %1139 = vmatpush1.msra.mxu0 0.0
    %1140 = vmatprep.subr.mxu0 0.0
    %1141 = vmatpush1.msra.mxu0 0.0
    %1142 = vmatprep.subr.mxu0 0.0
    %1143 = vmatpush1.msra.mxu0 0.0
    %1144 = vmatprep.subr.mxu0 0.0
    %1145 = vmatpush1.msra.mxu0 0.0
    %1146 = vmatprep.subr.mxu0 0.0
    %1147 = vmatpush1.msra.mxu0 0.0
    %1148 = vmatprep.subr.mxu0 0.0
    %1149 = vmatpush1.msra.mxu0 0.0
    %1150 = vmatprep.subr.mxu0 0.0
    %1151 = vmatpush1.msra.mxu0 0.0
    %1152 = vmatprep.subr.mxu0 0.0
    %1153 = vmatpush1.msra.mxu0 0.0
    %1154 = vmatprep.subr.mxu0 0.0
    %1155 = vmatpush1.msra.mxu0 0.0
    %1156 = vmatprep.subr.mxu0 0.0
    %1157 = vmatpush1.msra.mxu0 0.0
    %1158 = vmatprep.subr.mxu0 0.0
    %1159 = vmatpush1.msra.mxu0 0.0
    %1160 = vmatprep.subr.mxu0 0.0
    %1161 = vmatpush1.msra.mxu0 0.0
    %1162 = vmatprep.subr.mxu0 0.0
    %1163 = vmatpush1.msra.mxu0 0.0
    %1164 = vmatprep.subr.mxu0 0.0
    %1165 = vmatpush1.msra.mxu0 0.0
    %1166 = vmatprep.subr.mxu0 0.0
    %1167 = vmatpush1.msra.mxu0 0.0
    %1168 = vmatprep.subr.mxu0 0.0
    %1169 = vmatpush1.msra.mxu0 0.0
    %1170 = vmatprep.mubr.f32.mxu0 0.0
    %1171 = vmatmul.mubr.f32.gmra.mrb[0].mxu0 %v1104
    %v1172 = vpop.f32.mrb[0].mxu0
    %v1173 = vadd.f32 %v839, %v1172
    %v1174 = vpop.f32.mrb[0].mxu0
    %1175 = vdwg.mxu0
    %v1176 = vrot.slane %v656, 4
    %v1177 = vrot.slane %v657, 3
    %v1178 = vsel %vm674, %v1177, %v1176
    %v1179 = vrot.slane %v658, 2
    %v1180 = vsel %vm677, %v1179, %v1178
    %v1181 = vrot.slane %v659, 1
    %v1182 = vsel %vm680, %v1181, %v1180
    %v1183 = vsel %vm243, %v1182, 0
    %1185 = vmatprep.subr.mxu0 0.0
    %1186 = vmatpush1.msra.mxu0 %v843
    %1187 = vmatprep.subr.mxu0 0.0
    %1188 = vmatpush1.msra.mxu0 %v844
    %1189 = vmatprep.subr.mxu0 0.0
    %1190 = vmatpush1.msra.mxu0 %v845
    %1191 = vmatprep.subr.mxu0 0.0
    %1192 = vmatpush1.msra.mxu0 %v846
    %1193 = vmatprep.subr.mxu0 0.0
    %1194 = vmatpush1.msra.mxu0 0.0
    %1195 = vmatprep.subr.mxu0 0.0
    %1196 = vmatpush1.msra.mxu0 0.0
    %1197 = vmatprep.subr.mxu0 0.0
    %1198 = vmatpush1.msra.mxu0 0.0
    %1199 = vmatprep.subr.mxu0 0.0
    %1200 = vmatpush1.msra.mxu0 0.0
    %1201 = vmatprep.subr.mxu0 0.0
    %1202 = vmatpush1.msra.mxu0 0.0
    %1203 = vmatprep.subr.mxu0 0.0
    %1204 = vmatpush1.msra.mxu0 0.0
    %1205 = vmatprep.subr.mxu0 0.0
    %1206 = vmatpush1.msra.mxu0 0.0
    %1207 = vmatprep.subr.mxu0 0.0
    %1208 = vmatpush1.msra.mxu0 0.0
    %1209 = vmatprep.subr.mxu0 0.0
    %1210 = vmatpush1.msra.mxu0 0.0
    %1211 = vmatprep.subr.mxu0 0.0
    %1212 = vmatpush1.msra.mxu0 0.0
    %1213 = vmatprep.subr.mxu0 0.0
    %1214 = vmatpush1.msra.mxu0 0.0
    %1215 = vmatprep.subr.mxu0 0.0
    %1216 = vmatpush1.msra.mxu0 0.0
    %1217 = vmatprep.subr.mxu0 0.0
    %1218 = vmatpush1.msra.mxu0 0.0
    %1219 = vmatprep.subr.mxu0 0.0
    %1220 = vmatpush1.msra.mxu0 0.0
    %1221 = vmatprep.subr.mxu0 0.0
    %1222 = vmatpush1.msra.mxu0 0.0
    %1223 = vmatprep.subr.mxu0 0.0
    %1224 = vmatpush1.msra.mxu0 0.0
    %1225 = vmatprep.subr.mxu0 0.0
    %1226 = vmatpush1.msra.mxu0 0.0
    %1227 = vmatprep.subr.mxu0 0.0
    %1228 = vmatpush1.msra.mxu0 0.0
    %1229 = vmatprep.subr.mxu0 0.0
    %1230 = vmatpush1.msra.mxu0 0.0
    %1231 = vmatprep.subr.mxu0 0.0
    %1232 = vmatpush1.msra.mxu0 0.0
    %1233 = vmatprep.subr.mxu0 0.0
    %1234 = vmatpush1.msra.mxu0 0.0
    %1235 = vmatprep.subr.mxu0 0.0
    %1236 = vmatpush1.msra.mxu0 0.0
    %1237 = vmatprep.subr.mxu0 0.0
    %1238 = vmatpush1.msra.mxu0 0.0
    %1239 = vmatprep.subr.mxu0 0.0
    %1240 = vmatpush1.msra.mxu0 0.0
    %1241 = vmatprep.subr.mxu0 0.0
    %1242 = vmatpush1.msra.mxu0 0.0
    %1243 = vmatprep.subr.mxu0 0.0
    %1244 = vmatpush1.msra.mxu0 0.0
    %1245 = vmatprep.subr.mxu0 0.0
    %1246 = vmatpush1.msra.mxu0 0.0
    %1247 = vmatprep.subr.mxu0 0.0
    %1248 = vmatpush1.msra.mxu0 0.0
    %1249 = vmatprep.mubr.f32.mxu0 0.0
    %1250 = vmatmul.mubr.f32.gmra.mrb[0].mxu0 %v1183
    %v1251 = vpop.f32.mrb[0].mxu0
    %v1252 = vadd.f32 %v928, %v1251
    %v1253 = vpop.f32.mrb[0].mxu0
    %1254 = vdwg.mxu0
    %v1255 = vrot.slane %v656, 6
    %v1256 = vrot.slane %v657, 5
    %v1257 = vsel %vm674, %v1256, %v1255
    %v1258 = vrot.slane %v658, 4
    %v1259 = vsel %vm677, %v1258, %v1257
    %v1260 = vrot.slane %v659, 3
    %v1261 = vsel %vm680, %v1260, %v1259
    %v1262 = vsel %vm243, %v1261, 0
    %1264 = vmatprep.subr.mxu0 0.0
    %1265 = vmatpush1.msra.mxu0 %v932
    %1266 = vmatprep.subr.mxu0 0.0
    %1267 = vmatpush1.msra.mxu0 %v933
    %1268 = vmatprep.subr.mxu0 0.0
    %1269 = vmatpush1.msra.mxu0 %v934
    %1270 = vmatprep.subr.mxu0 0.0
    %1271 = vmatpush1.msra.mxu0 %v935
    %1272 = vmatprep.subr.mxu0 0.0
    %1273 = vmatpush1.msra.mxu0 0.0
    %1274 = vmatprep.subr.mxu0 0.0
    %1275 = vmatpush1.msra.mxu0 0.0
    %1276 = vmatprep.subr.mxu0 0.0
    %1277 = vmatpush1.msra.mxu0 0.0
    %1278 = vmatprep.subr.mxu0 0.0
    %1279 = vmatpush1.msra.mxu0 0.0
    %1280 = vmatprep.subr.mxu0 0.0
    %1281 = vmatpush1.msra.mxu0 0.0
    %1282 = vmatprep.subr.mxu0 0.0
    %1283 = vmatpush1.msra.mxu0 0.0
    %1284 = vmatprep.subr.mxu0 0.0
    %1285 = vmatpush1.msra.mxu0 0.0
    %1286 = vmatprep.subr.mxu0 0.0
    %1287 = vmatpush1.msra.mxu0 0.0
    %1288 = vmatprep.subr.mxu0 0.0
    %1289 = vmatpush1.msra.mxu0 0.0
    %1290 = vmatprep.subr.mxu0 0.0
    %1291 = vmatpush1.msra.mxu0 0.0
    %1292 = vmatprep.subr.mxu0 0.0
    %1293 = vmatpush1.msra.mxu0 0.0
    %1294 = vmatprep.subr.mxu0 0.0
    %1295 = vmatpush1.msra.mxu0 0.0
    %1296 = vmatprep.subr.mxu0 0.0
    %1297 = vmatpush1.msra.mxu0 0.0
    %1298 = vmatprep.subr.mxu0 0.0
    %1299 = vmatpush1.msra.mxu0 0.0
    %1300 = vmatprep.subr.mxu0 0.0
    %1301 = vmatpush1.msra.mxu0 0.0
    %1302 = vmatprep.subr.mxu0 0.0
    %1303 = vmatpush1.msra.mxu0 0.0
    %1304 = vmatprep.subr.mxu0 0.0
    %1305 = vmatpush1.msra.mxu0 0.0
    %1306 = vmatprep.subr.mxu0 0.0
    %1307 = vmatpush1.msra.mxu0 0.0
    %1308 = vmatprep.subr.mxu0 0.0
    %1309 = vmatpush1.msra.mxu0 0.0
    %1310 = vmatprep.subr.mxu0 0.0
    %1311 = vmatpush1.msra.mxu0 0.0
    %1312 = vmatprep.subr.mxu0 0.0
    %1313 = vmatpush1.msra.mxu0 0.0
    %1314 = vmatprep.subr.mxu0 0.0
    %1315 = vmatpush1.msra.mxu0 0.0
    %1316 = vmatprep.subr.mxu0 0.0
    %1317 = vmatpush1.msra.mxu0 0.0
    %1318 = vmatprep.subr.mxu0 0.0
    %1319 = vmatpush1.msra.mxu0 0.0
    %1320 = vmatprep.subr.mxu0 0.0
    %1321 = vmatpush1.msra.mxu0 0.0
    %1322 = vmatprep.subr.mxu0 0.0
    %1323 = vmatpush1.msra.mxu0 0.0
    %1324 = vmatprep.subr.mxu0 0.0
    %1325 = vmatpush1.msra.mxu0 0.0
    %1326 = vmatprep.subr.mxu0 0.0
    %1327 = vmatpush1.msra.mxu0 0.0
    %1328 = vmatprep.mubr.f32.mxu0 0.0
    %1329 = vmatmul.mubr.f32.gmra.mrb[0].mxu0 %v1262
    %v1330 = vpop.f32.mrb[0].mxu0
    %v1331 = vadd.f32 %v1017, %v1330
    %v1332 = vpop.f32.mrb[0].mxu0
    %1333 = vdwg.mxu0
    %v1334 = vadd.f32 %v1095, %v1173
    %v1335 = vadd.f32 %v1252, %v1331
    %v1336 = vadd.f32 %v1334, %v1335
    %v1337 = vld [vmem:[%s6] sm:$0x1]
    %v1339 = vlaneseq
    %v1340 = vshrl.u32 %v1339, 7
    %v1341 = vsub.s32 0, %v1340
    %v1342 = vrot.slane %v1337, %v1341
    %v1344 = vadd.f32 %v1336, %v1342
    %v1345 = vld [vmem:[#allocation6] sm:$0xf]
    %v1346 = vld [vmem:[#allocation11] sm:$0xff]
    %v1347 = vld [vmem:[#allocation11 + $0x8] sm:$0xff]
    %v1348 = vld [vmem:[#allocation11 + $0x10] sm:$0xff]
    %v1349 = vld [vmem:[#allocation11 + $0x18] sm:$0xff]
    %v1350 = vld [vmem:[#allocation11 + $0x20] sm:$0xff]
    %v1351 = vld [vmem:[#allocation11 + $0x28] sm:$0xff]
    %v1352 = vld [vmem:[#allocation11 + $0x30] sm:$0xff]
    %v1353 = vld [vmem:[#allocation11 + $0x38] sm:$0xff]
    %v1354 = vld [vmem:[#allocation11 + $0x40] sm:$0xff]
    %v1355 = vld [vmem:[#allocation11 + $0x48] sm:$0xff]
    %v1356 = vld [vmem:[#allocation11 + $0x50] sm:$0xff]
    %v1357 = vld [vmem:[#allocation11 + $0x58] sm:$0xff]
    %v1358 = vld [vmem:[#allocation11 + $0x60] sm:$0xff]
    %v1359 = vld [vmem:[#allocation11 + $0x68] sm:$0xff]
    %v1360 = vld [vmem:[#allocation11 + $0x70] sm:$0xff]
    %v1361 = vld [vmem:[#allocation11 + $0x78] sm:$0xff]
    %v1362 = vld [vmem:[#allocation12] sm:$0xff]
    %v1363 = vld [vmem:[#allocation12 + $0x8] sm:$0xff]
    %v1364 = vld [vmem:[#allocation12 + $0x10] sm:$0xff]
    %v1365 = vld [vmem:[#allocation12 + $0x18] sm:$0xff]
    %v1366 = vld [vmem:[#allocation12 + $0x20] sm:$0xff]
    %v1367 = vld [vmem:[#allocation12 + $0x28] sm:$0xff]
    %v1368 = vld [vmem:[#allocation12 + $0x30] sm:$0xff]
    %v1369 = vld [vmem:[#allocation12 + $0x38] sm:$0xff]
    %v1370 = vld [vmem:[#allocation12 + $0x40] sm:$0xff]
    %v1371 = vld [vmem:[#allocation12 + $0x48] sm:$0xff]
    %v1372 = vld [vmem:[#allocation12 + $0x50] sm:$0xff]
    %v1373 = vld [vmem:[#allocation12 + $0x58] sm:$0xff]
    %v1374 = vld [vmem:[#allocation12 + $0x60] sm:$0xff]
    %v1375 = vld [vmem:[#allocation12 + $0x68] sm:$0xff]
    %v1376 = vld [vmem:[#allocation12 + $0x70] sm:$0xff]
    %v1377 = vld [vmem:[#allocation12 + $0x78] sm:$0xff]
    %1378 = vmatprep.subr.mxu0 0.0
    %1379 = vmatpush1.msra.mxu0 %v1362
    %1380 = vmatprep.subr.mxu0 0.0
    %1381 = vmatpush1.msra.mxu0 %v1363
    %1382 = vmatprep.subr.mxu0 0.0
    %1383 = vmatpush1.msra.mxu0 %v1364
    %1384 = vmatprep.subr.mxu0 0.0
    %1385 = vmatpush1.msra.mxu0 %v1365
    %1386 = vmatprep.subr.mxu0 0.0
    %1387 = vmatpush1.msra.mxu0 %v1366
    %1388 = vmatprep.subr.mxu0 0.0
    %1389 = vmatpush1.msra.mxu0 %v1367
    %1390 = vmatprep.subr.mxu0 0.0
    %1391 = vmatpush1.msra.mxu0 %v1368
    %1392 = vmatprep.subr.mxu0 0.0
    %1393 = vmatpush1.msra.mxu0 %v1369
    %1394 = vmatprep.subr.mxu0 0.0
    %1395 = vmatpush1.msra.mxu0 %v1370
    %1396 = vmatprep.subr.mxu0 0.0
    %1397 = vmatpush1.msra.mxu0 %v1371
    %1398 = vmatprep.subr.mxu0 0.0
    %1399 = vmatpush1.msra.mxu0 %v1372
    %1400 = vmatprep.subr.mxu0 0.0
    %1401 = vmatpush1.msra.mxu0 %v1373
    %1402 = vmatprep.subr.mxu0 0.0
    %1403 = vmatpush1.msra.mxu0 %v1374
    %1404 = vmatprep.subr.mxu0 0.0
    %1405 = vmatpush1.msra.mxu0 %v1375
    %1406 = vmatprep.subr.mxu0 0.0
    %1407 = vmatpush1.msra.mxu0 %v1376
    %1408 = vmatprep.subr.mxu0 0.0
    %1409 = vmatpush1.msra.mxu0 %v1377
    %1410 = vmatprep.subr.mxu0 0.0
    %1411 = vmatpush1.msra.mxu0 0.0
    %1412 = vmatprep.subr.mxu0 0.0
    %1413 = vmatpush1.msra.mxu0 0.0
    %1414 = vmatprep.subr.mxu0 0.0
    %1415 = vmatpush1.msra.mxu0 0.0
    %1416 = vmatprep.subr.mxu0 0.0
    %1417 = vmatpush1.msra.mxu0 0.0
    %1418 = vmatprep.subr.mxu0 0.0
    %1419 = vmatpush1.msra.mxu0 0.0
    %1420 = vmatprep.subr.mxu0 0.0
    %1421 = vmatpush1.msra.mxu0 0.0
    %1422 = vmatprep.subr.mxu0 0.0
    %1423 = vmatpush1.msra.mxu0 0.0
    %1424 = vmatprep.subr.mxu0 0.0
    %1425 = vmatpush1.msra.mxu0 0.0
    %1426 = vmatprep.subr.mxu0 0.0
    %1427 = vmatpush1.msra.mxu0 0.0
    %1428 = vmatprep.subr.mxu0 0.0
    %1429 = vmatpush1.msra.mxu0 0.0
    %1430 = vmatprep.subr.mxu0 0.0
    %1431 = vmatpush1.msra.mxu0 0.0
    %1432 = vmatprep.subr.mxu0 0.0
    %1433 = vmatpush1.msra.mxu0 0.0
    %1434 = vmatprep.subr.mxu0 0.0
    %1435 = vmatpush1.msra.mxu0 0.0
    %1436 = vmatprep.subr.mxu0 0.0
    %1437 = vmatpush1.msra.mxu0 0.0
    %1438 = vmatprep.subr.mxu0 0.0
    %1439 = vmatpush1.msra.mxu0 0.0
    %1440 = vmatprep.subr.mxu0 0.0
    %1441 = vmatpush1.msra.mxu0 0.0
    %1442 = vmatprep.mubr.f32.mxu0 0.0
    %1443 = vmatmul.mubr.f32.gmra.mrb[0].mxu0 %v1344
    %v1444 = vpop.f32.mrb[0].mxu0
    %v1445 = vadd.f32 0.0, %v1444
    %v1446 = vpop.f32.mrb[0].mxu0
    %1447 = vdwg.mxu0
    %1448 = vmatprep.subr.mxu0 0.0
    %1449 = vmatpush1.msra.mxu0 %v1346
    %1450 = vmatprep.subr.mxu0 0.0
    %1451 = vmatpush1.msra.mxu0 %v1347
    %1452 = vmatprep.subr.mxu0 0.0
    %1453 = vmatpush1.msra.mxu0 %v1348
    %1454 = vmatprep.subr.mxu0 0.0
    %1455 = vmatpush1.msra.mxu0 %v1349
    %1456 = vmatprep.subr.mxu0 0.0
    %1457 = vmatpush1.msra.mxu0 %v1350
    %1458 = vmatprep.subr.mxu0 0.0
    %1459 = vmatpush1.msra.mxu0 %v1351
    %1460 = vmatprep.subr.mxu0 0.0
    %1461 = vmatpush1.msra.mxu0 %v1352
    %1462 = vmatprep.subr.mxu0 0.0
    %1463 = vmatpush1.msra.mxu0 %v1353
    %1464 = vmatprep.subr.mxu0 0.0
    %1465 = vmatpush1.msra.mxu0 %v1354
    %1466 = vmatprep.subr.mxu0 0.0
    %1467 = vmatpush1.msra.mxu0 %v1355
    %1468 = vmatprep.subr.mxu0 0.0
    %1469 = vmatpush1.msra.mxu0 %v1356
    %1470 = vmatprep.subr.mxu0 0.0
    %1471 = vmatpush1.msra.mxu0 %v1357
    %1472 = vmatprep.subr.mxu0 0.0
    %1473 = vmatpush1.msra.mxu0 %v1358
    %1474 = vmatprep.subr.mxu0 0.0
    %1475 = vmatpush1.msra.mxu0 %v1359
    %1476 = vmatprep.subr.mxu0 0.0
    %1477 = vmatpush1.msra.mxu0 %v1360
    %1478 = vmatprep.subr.mxu0 0.0
    %1479 = vmatpush1.msra.mxu0 %v1361
    %1480 = vmatprep.subr.mxu0 0.0
    %1481 = vmatpush1.msra.mxu0 0.0
    %1482 = vmatprep.subr.mxu0 0.0
    %1483 = vmatpush1.msra.mxu0 0.0
    %1484 = vmatprep.subr.mxu0 0.0
    %1485 = vmatpush1.msra.mxu0 0.0
    %1486 = vmatprep.subr.mxu0 0.0
    %1487 = vmatpush1.msra.mxu0 0.0
    %1488 = vmatprep.subr.mxu0 0.0
    %1489 = vmatpush1.msra.mxu0 0.0
    %1490 = vmatprep.subr.mxu0 0.0
    %1491 = vmatpush1.msra.mxu0 0.0
    %1492 = vmatprep.subr.mxu0 0.0
    %1493 = vmatpush1.msra.mxu0 0.0
    %1494 = vmatprep.subr.mxu0 0.0
    %1495 = vmatpush1.msra.mxu0 0.0
    %1496 = vmatprep.subr.mxu0 0.0
    %1497 = vmatpush1.msra.mxu0 0.0
    %1498 = vmatprep.subr.mxu0 0.0
    %1499 = vmatpush1.msra.mxu0 0.0
    %1500 = vmatprep.subr.mxu0 0.0
    %1501 = vmatpush1.msra.mxu0 0.0
    %1502 = vmatprep.subr.mxu0 0.0
    %1503 = vmatpush1.msra.mxu0 0.0
    %1504 = vmatprep.subr.mxu0 0.0
    %1505 = vmatpush1.msra.mxu0 0.0
    %1506 = vmatprep.subr.mxu0 0.0
    %1507 = vmatpush1.msra.mxu0 0.0
    %1508 = vmatprep.subr.mxu0 0.0
    %1509 = vmatpush1.msra.mxu0 0.0
    %1510 = vmatprep.subr.mxu0 0.0
    %1511 = vmatpush1.msra.mxu0 0.0
    %1512 = vmatprep.mubr.f32.mxu0 0.0
    %1513 = vmatmul.mubr.f32.gmra.mrb[0].mxu0 %v1345
    %v1514 = vpop.f32.mrb[0].mxu0
    %v1515 = vadd.f32 %v1445, %v1514
    %v1516 = vpop.f32.mrb[0].mxu0
    %1517 = vdwg.mxu0
    %v1518 = vld [vmem:[#allocation14] sm:$0x1]
    %v1520 = vlaneseq
    %v1521 = vshrl.u32 %v1520, 7
    %v1522 = vsub.s32 0, %v1521
    %v1523 = vrot.slane %v1518, %v1522
    %v1525 = vadd.f32 %v1515, %v1523
    %1526 = vst [vmem:[#allocation15] sm:$0xf] %v1525
    // Predicated region
    $region70: #{rnn_decoder_forward.1} parent=1 // pred_check
      _
    $region71: #{rnn_decoder_forward.1} parent=1 // pred_check_branch
      %1528 = sbr.rel (0) target = $region73
    $region72: #{rnn_decoder_forward.1} parent=1 // pred_region
      %s1530 = ssub.s32 64, 64
      %1531 = vsyncadd [#allocation5], %s1530
      %s1533 = sshll.u32 [#allocation15], 4
      %s1534 = int_to_ptr.vmem [resolvable:$true] %s1533
      %1536 = dma.vmem_to_hbm [thread:$0]  %s1534, 64, %s10, [#allocation5]
    $region73: #{rnn_decoder_forward.1} parent=1 // pred_fallthru
      _
    // Predicated region
    $region74: #{rnn_decoder_forward.1} parent=1 // pred_check
      _
    $region75: #{rnn_decoder_forward.1} parent=1 // pred_check_branch
      %1538 = sbr.rel (0) target = $region77
    $region76: #{rnn_decoder_forward.1} parent=1 // pred_region
      %1539 = dma.done [#allocation5], 64
    $region77: #{rnn_decoder_forward.1} parent=1 // pred_fallthru
      _
    %1540 = vsyncpa [#allocation4], 1
    %1541 = vsyncpa [#allocation7], 1
    %1542 = vsyncpa [#allocation10], 1
    %1543 = vsyncpa [#allocation13], 1
    %1544 = vsyncpa [#allocation5], 1

</llo_original>
